<compile_context>
chip_gen: v5e
topology: v5e:2x2
jax: 0.10.0
libtpu: 0.0.40
codegen_flags: <defaults>
</compile_context>

<pallas_src>
import math
import functools

import jax
import jax.numpy as jnp
from jax.experimental import pallas as pl
from jax.experimental.pallas import tpu as pltpu


# -----------------------------------------------------------------------------
# Pass 1: fused QKV projection, head split, q pre-scaling.
# -----------------------------------------------------------------------------
def _qkv_proj_kernel(x_ref, wq_ref, bq_ref, wk_ref, bk_ref, wv_ref, bv_ref,
                     q_ref, k_ref, v_ref, *, n_head, d_head, q_scale):
    x = x_ref[0]                                              # (TS, E) lane-dense
    ts = x.shape[0]
    q = (jnp.dot(x, wq_ref[...], preferred_element_type=jnp.float32)
         + bq_ref[...]) * q_scale                             # scale (incl. log2e) folded into q
    k = jnp.dot(x, wk_ref[...], preferred_element_type=jnp.float32) + bk_ref[...]
    v = jnp.dot(x, wv_ref[...], preferred_element_type=jnp.float32) + bv_ref[...]
    # Split heads once per token here (instead of once per (q-tile, kv-tile)
    # step inside the attention loop) and store as (H, TS, dh).
    q_ref[0] = jnp.transpose(q.reshape(ts, n_head, d_head), (1, 0, 2)).astype(q_ref.dtype)
    k_ref[0] = jnp.transpose(k.reshape(ts, n_head, d_head), (1, 0, 2)).astype(k_ref.dtype)
    v_ref[0] = jnp.transpose(v.reshape(ts, n_head, d_head), (1, 0, 2)).astype(v_ref.dtype)


# -----------------------------------------------------------------------------
# Pass 2: flash-style attention (online softmax, exp2) + fused output proj.
# -----------------------------------------------------------------------------
def _attention_kernel(q_ref, k_ref, v_ref, wo_ref, bo_ref, o_ref,
                      m_scr, l_scr, acc_scr, *, n_head, d_head):
    ki = pl.program_id(2)
    nk = pl.num_programs(2)
    cdt = q_ref.dtype          # MXU operand dtype == input dtype (bf16 stays bf16)

    @pl.when(ki == 0)
    def _init():
        m_scr[...] = jnp.full(m_scr.shape, -jnp.inf, dtype=m_scr.dtype)
        l_scr[...] = jnp.zeros(l_scr.shape, dtype=l_scr.dtype)
        acc_scr[...] = jnp.zeros(acc_scr.shape, dtype=acc_scr.dtype)

    # q is pre-scaled by log2(e)/sqrt(d_head), so exp2 below == natural softmax.
    s = jnp.einsum("hqd,hkd->hqk", q_ref[0], k_ref[0],
                   preferred_element_type=jnp.float32)        # (H, TQ, TK) f32

    m_prev = m_scr[...]
    m_new = jnp.maximum(m_prev, jnp.max(s, axis=-1, keepdims=True))
    alpha = jnp.exp2(m_prev - m_new)
    p = jnp.exp2(s - m_new)                                   # (H, TQ, TK) f32
    l_scr[...] = alpha * l_scr[...] + jnp.sum(p, axis=-1, keepdims=True)
    acc_scr[...] = alpha * acc_scr[...] + jnp.einsum(
        "hqk,hkd->hqd", p.astype(cdt), v_ref[0],
        preferred_element_type=jnp.float32)
    m_scr[...] = m_new

    @pl.when(ki == nk - 1)
    def _finalize():
        tq = acc_scr.shape[1]
        attn = acc_scr[...] * pl.reciprocal(l_scr[...], approx=True)   # (H, TQ, dh) f32
        attn2 = jnp.transpose(attn, (1, 0, 2)).reshape(tq, n_head * d_head)
        out = jnp.dot(attn2.astype(cdt), wo_ref[...],
                      preferred_element_type=jnp.float32) + bo_ref[...]
        o_ref[0] = out.astype(o_ref.dtype)


# -----------------------------------------------------------------------------
# Helpers.
# -----------------------------------------------------------------------------
@functools.lru_cache(maxsize=None)
def _single_buffer_supported():
    """Probe once whether this JAX/Mosaic supports pl.Buffered(1) specs."""
    def _copy(x_ref, o_ref):
        o_ref[...] = x_ref[...]
    try:
        spec = pl.BlockSpec((8, 128), lambda i: (0, 0), pipeline_mode=pl.Buffered(1))
        x = jnp.zeros((8, 128), jnp.float32)
        out = pl.pallas_call(
            _copy,
            out_shape=jax.ShapeDtypeStruct((8, 128), jnp.float32),
            grid=(1,),
            in_specs=[spec],
            out_specs=pl.BlockSpec((8, 128), lambda i: (0, 0)),
        )(x)
        jax.block_until_ready(out)
        return True
    except Exception:
        return False


def _invariant_spec(shape):
    """BlockSpec for a grid-invariant operand (weights/biases): fetched once,
    single-buffered when supported (reclaims double-buffer VMEM on v7x)."""
    index_map = lambda *_: (0,) * len(shape)
    if _single_buffer_supported():
        return pl.BlockSpec(shape, index_map, pipeline_mode=pl.Buffered(1))
    return pl.BlockSpec(shape, index_map)


def _vmem_limit_bytes():
    """Generation-aware VMEM budget: ~75% of physical per-core VMEM."""
    cap = 64 * 1024 * 1024
    try:
        info = pltpu.get_tpu_info()
        cap = int(getattr(info, "vmem_capacity_bytes", cap)) or cap
    except Exception:
        pass
    return (cap * 3) // 4


def _pick_tile(s, target):
    """Largest tile <= target that divides s and is a multiple of 8 (else s)."""
    if s <= target:
        return s
    for t in range(target, 7, -1):
        if s % t == 0 and t % 8 == 0:
            return t
    return s


# -----------------------------------------------------------------------------
# Wrapper.
# -----------------------------------------------------------------------------
def self_attention(x, params, *, n_head, tq=None, tk=None, ts=None):
    """x: (B, S, E). params use PyTorch nn.Linear conventions. Returns (B, S, E)."""
    B, S, E = x.shape
    assert E % n_head == 0, "n_embed must be divisible by n_head"
    d_head = E // n_head
    dtype = x.dtype

    ts = ts if ts is not None else _pick_tile(S, 512)   # projection token tile
    tq = tq if tq is not None else _pick_tile(S, 512)   # attention query tile
    tk = tk if tk is not None else _pick_tile(S, 256)   # attention kv tile
    assert S % ts == 0 and S % tq == 0 and S % tk == 0, \
        "sequence length must be divisible by the tile sizes"

    vmem_limit = _vmem_limit_bytes()

    w_in = params["in_proj_w"]     # (3E, E): rows [0:E)=q, [E:2E)=k, [2E:3E)=v
    b_in = params["in_proj_b"]     # (3E,)
    w_out = params["out_proj_w"]   # (E, E)
    b_out = params["out_proj_b"]   # (E,)

    # Split q/k/v, pre-transpose (kernel does x @ W + b), cast to input dtype.
    wq = jnp.asarray(w_in[:E].T, dtype)
    wk = jnp.asarray(w_in[E:2 * E].T, dtype)
    wv = jnp.asarray(w_in[2 * E:].T, dtype)
    bq = jnp.asarray(b_in[:E].reshape(1, E), dtype)
    bk = jnp.asarray(b_in[E:2 * E].reshape(1, E), dtype)
    bv = jnp.asarray(b_in[2 * E:].reshape(1, E), dtype)
    wo = jnp.asarray(w_out.T, dtype)
    bo = jnp.asarray(b_out.reshape(1, E), dtype)

    # 1/sqrt(d_head) softmax scale with log2(e) folded in (exp2 in the kernel).
    q_scale = math.log2(math.e) / math.sqrt(d_head)

    # ---- Pass 1: QKV projection into (B, H, S, dh) -------------------------
    proj_kernel = functools.partial(
        _qkv_proj_kernel, n_head=n_head, d_head=d_head, q_scale=q_scale)
    qkv_shape = jax.ShapeDtypeStruct((B, n_head, S, d_head), dtype)
    q, k, v = pl.pallas_call(
        proj_kernel,
        out_shape=(qkv_shape, qkv_shape, qkv_shape),
        grid_spec=pltpu.PrefetchScalarGridSpec(
            num_scalar_prefetch=0,
            grid=(B, S // ts),
            in_specs=[
                pl.BlockSpec((1, ts, E), lambda b, si: (b, si, 0)),
                _invariant_spec((E, E)), _invariant_spec((1, E)),   # wq, bq
                _invariant_spec((E, E)), _invariant_spec((1, E)),   # wk, bk
                _invariant_spec((E, E)), _invariant_spec((1, E)),   # wv, bv
            ],
            out_specs=[
                pl.BlockSpec((1, n_head, ts, d_head), lambda b, si: (b, 0, si, 0)),
                pl.BlockSpec((1, n_head, ts, d_head), lambda b, si: (b, 0, si, 0)),
                pl.BlockSpec((1, n_head, ts, d_head), lambda b, si: (b, 0, si, 0)),
            ],
        ),
        compiler_params=pltpu.CompilerParams(
            dimension_semantics=("parallel", "parallel"),
            vmem_limit_bytes=vmem_limit,
        ),
    )(x, wq, bq, wk, bk, wv, bv)

    # ---- Pass 2: flash attention + fused output projection -----------------
    # NOTE: on v5e, once projections are hoisted the thin per-step compute can
    # expose the kv-tile DMA; consider pipeline_mode=pl.Buffered(3) on k/v.
    attn_kernel = functools.partial(_attention_kernel, n_head=n_head, d_head=d_head)
    out = pl.pallas_call(
        attn_kernel,
        out_shape=jax.ShapeDtypeStruct((B, S, E), dtype),
        grid_spec=pltpu.PrefetchScalarGridSpec(
            num_scalar_prefetch=0,
            grid=(B, S // tq, S // tk),
            in_specs=[
                pl.BlockSpec((1, n_head, tq, d_head), lambda b, qi, ki: (b, 0, qi, 0)),
                pl.BlockSpec((1, n_head, tk, d_head), lambda b, qi, ki: (b, 0, ki, 0)),
                pl.BlockSpec((1, n_head, tk, d_head), lambda b, qi, ki: (b, 0, ki, 0)),
                _invariant_spec((E, E)),   # wo
                _invariant_spec((1, E)),   # bo
            ],
            out_specs=pl.BlockSpec((1, tq, E), lambda b, qi, ki: (b, qi, 0)),
            scratch_shapes=[
                pltpu.VMEM((n_head, tq, 1), jnp.float32),        # running max (log2 units)
                pltpu.VMEM((n_head, tq, 1), jnp.float32),        # running denominator
                pltpu.VMEM((n_head, tq, d_head), jnp.float32),   # running numerator
            ],
        ),
        compiler_params=pltpu.CompilerParams(
            dimension_semantics=("parallel", "parallel", "arbitrary"),
            vmem_limit_bytes=vmem_limit,
        ),
    )(q, k, v, wo, bo)
    return out


# -----------------------------------------------------------------------------
# Plain-JAX reference replicating the PyTorch SelfAttention.forward exactly.
# -----------------------------------------------------------------------------
def reference(x, params, *, n_head):
    B, S, E = x.shape
    dh = E // n_head
    qkv = x @ params["in_proj_w"].T + params["in_proj_b"]
    q, k, v = jnp.split(qkv, 3, axis=-1)
    q = q.reshape(B, S, n_head, dh).transpose(0, 2, 1, 3)
    k = k.reshape(B, S, n_head, dh).transpose(0, 2, 1, 3)
    v = v.reshape(B, S, n_head, dh).transpose(0, 2, 1, 3)
    s = (q @ k.transpose(0, 1, 3, 2)) / math.sqrt(dh)
    p = jax.nn.softmax(s, axis=-1)
    o = (p @ v).transpose(0, 2, 1, 3).reshape(B, S, E)
    return o @ params["out_proj_w"].T + params["out_proj_b"]


if __name__ == "__main__":
    # Small synthetic problem consistent with the module's forward.
    B, S, n_embed, n_head = 2, 16, 32, 4

    key = jax.random.PRNGKey(0)
    ks = jax.random.split(key, 5)

    # nn.Linear conventions: weight = (out, in), bias = (out,)
    params = {
        "in_proj_w": jax.random.normal(ks[0], (3 * n_embed, n_embed), jnp.float32) * 0.05,
        "in_proj_b": jax.random.normal(ks[1], (3 * n_embed,), jnp.float32) * 0.05,
        "out_proj_w": jax.random.normal(ks[2], (n_embed, n_embed), jnp.float32) * 0.05,
        "out_proj_b": jax.random.normal(ks[3], (n_embed,), jnp.float32) * 0.05,
    }
    x = jax.random.normal(ks[4], (B, S, n_embed), jnp.float32)

    # Small tiles so the toy run exercises the full multi-step grids in both
    # passes (init / online-softmax accumulate / finalize paths all taken).
    out = self_attention(x, params, n_head=n_head, tq=8, tk=8, ts=8)
    out = jax.block_until_ready(out)

    ref = reference(x, params, n_head=n_head)
    assert out.shape == (B, S, n_embed)
    assert out.dtype == x.dtype
    max_err = float(jnp.max(jnp.abs(out - ref)))
    assert jnp.allclose(out, ref, atol=3e-3, rtol=3e-3), \
        f"mismatch vs reference (max err {max_err})"

    print("KERNEL_OK")
</pallas_src>

<mosaic_0001>
module attributes {stable_mosaic.version = 11 : i64} {
  func.func @_copy(%arg0: i32, %arg1: memref<8x128xf32, #tpu.memory_space<vmem>>, %arg2: memref<8x128xf32, #tpu.memory_space<vmem>>) attributes {dimension_semantics = [#tpu.dimension_semantics<arbitrary>], iteration_bounds = array<i64: 1>, scalar_prefetch = 0 : i64, scratch_operands = 0 : i64, tpu.core_type = #tpu.core_type<tc>, window_params = [{pipeline_mode = #tpu.pipeline_mode<synchronous>, transform_indices = @transform_0, window_bounds = array<i64: 8, 128>}, {pipeline_mode = #tpu.pipeline_mode<synchronous>, transform_indices = @transform_1, window_bounds = array<i64: 8, 128>}]} {
    %c0 = arith.constant 0 : index
    %c0_0 = arith.constant 0 : index
    %0 = vector.load %arg1[%c0, %c0_0] : memref<8x128xf32, #tpu.memory_space<vmem>>, vector<8x128xf32>
    %c0_1 = arith.constant 0 : index
    %c0_2 = arith.constant 0 : index
    %1 = vector.load %arg2[%c0_1, %c0_2] : memref<8x128xf32, #tpu.memory_space<vmem>>, vector<8x128xf32>
    tpu.vector_store %arg2[%c0_1, %c0_2], %0 {strides = array<i32>} : memref<8x128xf32, #tpu.memory_space<vmem>>, vector<8x128xf32>,
    return
  }
  func.func @transform_0(%arg0: i32) -> (i32, i32) {
    %c0_i32 = arith.constant 0 : i32
    %c0_i32_0 = arith.constant 0 : i32
    %c0_i32_1 = arith.constant 0 : i32
    return %c0_i32, %c0_i32_0 : i32, i32
  }
  func.func @transform_1(%arg0: i32) -> (i32, i32) {
    %c0_i32 = arith.constant 0 : i32
    %c0_i32_0 = arith.constant 0 : i32
    %c0_i32_1 = arith.constant 0 : i32
    return %c0_i32, %c0_i32_0 : i32, i32
  }
}

module attributes {stable_mosaic.version = 11 : i64} {
  func.func @_qkv_proj_kernel(%arg0: i32, %arg1: i32, %arg2: memref<1x8x32xf32, #tpu.memory_space<vmem>>, %arg3: memref<32x32xf32, #tpu.memory_space<vmem>>, %arg4: memref<1x32xf32, #tpu.memory_space<vmem>>, %arg5: memref<32x32xf32, #tpu.memory_space<vmem>>, %arg6: memref<1x32xf32, #tpu.memory_space<vmem>>, %arg7: memref<32x32xf32, #tpu.memory_space<vmem>>, %arg8: memref<1x32xf32, #tpu.memory_space<vmem>>, %arg9: memref<1x4x8x8xf32, #tpu.memory_space<vmem>>, %arg10: memref<1x4x8x8xf32, #tpu.memory_space<vmem>>, %arg11: memref<1x4x8x8xf32, #tpu.memory_space<vmem>>) attributes {dimension_semantics = [#tpu.dimension_semantics<parallel>, #tpu.dimension_semantics<parallel>], iteration_bounds = array<i64: 2, 2>, scalar_prefetch = 0 : i64, scratch_operands = 0 : i64, tpu.core_type = #tpu.core_type<tc>, window_params = [{transform_indices = @transform_0, window_bounds = array<i64: 1, 8, 32>}, {pipeline_mode = #tpu.pipeline_mode<synchronous>, transform_indices = @transform_1, window_bounds = array<i64: 32, 32>}, {pipeline_mode = #tpu.pipeline_mode<synchronous>, transform_indices = @transform_2, window_bounds = array<i64: 1, 32>}, {pipeline_mode = #tpu.pipeline_mode<synchronous>, transform_indices = @transform_3, window_bounds = array<i64: 32, 32>}, {pipeline_mode = #tpu.pipeline_mode<synchronous>, transform_indices = @transform_4, window_bounds = array<i64: 1, 32>}, {pipeline_mode = #tpu.pipeline_mode<synchronous>, transform_indices = @transform_5, window_bounds = array<i64: 32, 32>}, {pipeline_mode = #tpu.pipeline_mode<synchronous>, transform_indices = @transform_6, window_bounds = array<i64: 1, 32>}, {transform_indices = @transform_7, window_bounds = array<i64: 1, 4, 8, 8>}, {transform_indices = @transform_8, window_bounds = array<i64: 1, 4, 8, 8>}, {transform_indices = @transform_9, window_bounds = array<i64: 1, 4, 8, 8>}]} {
    %c0 = arith.constant 0 : index
    %c0_0 = arith.constant 0 : index
    %c0_1 = arith.constant 0 : index
    %0 = vector.load %arg2[%c0, %c0_0, %c0_1] : memref<1x8x32xf32, #tpu.memory_space<vmem>>, vector<1x8x32xf32>
    %1 = vector.shape_cast %0 : vector<1x8x32xf32> to vector<8x32xf32>
    %c0_2 = arith.constant 0 : index
    %c0_3 = arith.constant 0 : index
    %2 = vector.load %arg3[%c0_2, %c0_3] : memref<32x32xf32, #tpu.memory_space<vmem>>, vector<32x32xf32>
    %cst = arith.constant dense<0.000000e+00> : vector<8x32xf32>
    %3 = tpu.matmul %1, %2, %cst {dimension_numbers = #tpu.dot_dimension_numbers<[1], [0], [0], [1], [0, 0, 1, 1], [], []>} : vector<8x32xf32>, vector<32x32xf32>, vector<8x32xf32> -> vector<8x32xf32>
    %c0_4 = arith.constant 0 : index
    %c0_5 = arith.constant 0 : index
    %4 = vector.load %arg4[%c0_4, %c0_5] : memref<1x32xf32, #tpu.memory_space<vmem>>, vector<1x32xf32>
    %5 = vector.broadcast %4 : vector<1x32xf32> to vector<8x32xf32>
    %6 = arith.addf %3, %5 : vector<8x32xf32>
    %cst_6 = arith.constant 0.510069728 : f32
    %7 = vector.broadcast %cst_6 : f32 to vector<8x32xf32>
    %8 = arith.mulf %6, %7 : vector<8x32xf32>
    %c0_7 = arith.constant 0 : index
    %c0_8 = arith.constant 0 : index
    %9 = vector.load %arg5[%c0_7, %c0_8] : memref<32x32xf32, #tpu.memory_space<vmem>>, vector<32x32xf32>
    %cst_9 = arith.constant dense<0.000000e+00> : vector<8x32xf32>
    %10 = tpu.matmul %1, %9, %cst_9 {dimension_numbers = #tpu.dot_dimension_numbers<[1], [0], [0], [1], [0, 0, 1, 1], [], []>} : vector<8x32xf32>, vector<32x32xf32>, vector<8x32xf32> -> vector<8x32xf32>
    %c0_10 = arith.constant 0 : index
    %c0_11 = arith.constant 0 : index
    %11 = vector.load %arg6[%c0_10, %c0_11] : memref<1x32xf32, #tpu.memory_space<vmem>>, vector<1x32xf32>
    %12 = vector.broadcast %11 : vector<1x32xf32> to vector<8x32xf32>
    %13 = arith.addf %10, %12 : vector<8x32xf32>
    %c0_12 = arith.constant 0 : index
    %c0_13 = arith.constant 0 : index
    %14 = vector.load %arg7[%c0_12, %c0_13] : memref<32x32xf32, #tpu.memory_space<vmem>>, vector<32x32xf32>
    %cst_14 = arith.constant dense<0.000000e+00> : vector<8x32xf32>
    %15 = tpu.matmul %1, %14, %cst_14 {dimension_numbers = #tpu.dot_dimension_numbers<[1], [0], [0], [1], [0, 0, 1, 1], [], []>} : vector<8x32xf32>, vector<32x32xf32>, vector<8x32xf32> -> vector<8x32xf32>
    %c0_15 = arith.constant 0 : index
    %c0_16 = arith.constant 0 : index
    %16 = vector.load %arg8[%c0_15, %c0_16] : memref<1x32xf32, #tpu.memory_space<vmem>>, vector<1x32xf32>
    %17 = vector.broadcast %16 : vector<1x32xf32> to vector<8x32xf32>
    %18 = arith.addf %15, %17 : vector<8x32xf32>
    %19 = vector.shape_cast %8 : vector<8x32xf32> to vector<8x4x8xf32>
    %20 = tpu.transpose %19, [1, 0, 2] : vector<8x4x8xf32> -> vector<4x8x8xf32>
    %c0_17 = arith.constant 0 : index
    %c0_18 = arith.constant 0 : index
    %c0_19 = arith.constant 0 : index
    %c0_20 = arith.constant 0 : index
    %21 = vector.load %arg9[%c0_17, %c0_18, %c0_19, %c0_20] : memref<1x4x8x8xf32, #tpu.memory_space<vmem>>, vector<1x4x8x8xf32>
    %22 = vector.shape_cast %21 : vector<1x4x8x8xf32> to vector<4x8x8xf32>
    %23 = vector.shape_cast %20 : vector<4x8x8xf32> to vector<1x4x8x8xf32>
    tpu.vector_store %arg9[%c0_17, %c0_18, %c0_19, %c0_20], %23 {strides = array<i32>} : memref<1x4x8x8xf32, #tpu.memory_space<vmem>>, vector<1x4x8x8xf32>,
    %24 = vector.shape_cast %13 : vector<8x32xf32> to vector<8x4x8xf32>
    %25 = tpu.transpose %24, [1, 0, 2] : vector<8x4x8xf32> -> vector<4x8x8xf32>
    %c0_21 = arith.constant 0 : index
    %c0_22 = arith.constant 0 : index
    %c0_23 = arith.constant 0 : index
    %c0_24 = arith.constant 0 : index
    %26 = vector.load %arg10[%c0_21, %c0_22, %c0_23, %c0_24] : memref<1x4x8x8xf32, #tpu.memory_space<vmem>>, vector<1x4x8x8xf32>
    %27 = vector.shape_cast %26 : vector<1x4x8x8xf32> to vector<4x8x8xf32>
    %28 = vector.shape_cast %25 : vector<4x8x8xf32> to vector<1x4x8x8xf32>
    tpu.vector_store %arg10[%c0_21, %c0_22, %c0_23, %c0_24], %28 {strides = array<i32>} : memref<1x4x8x8xf32, #tpu.memory_space<vmem>>, vector<1x4x8x8xf32>,
    %29 = vector.shape_cast %18 : vector<8x32xf32> to vector<8x4x8xf32>
    %30 = tpu.transpose %29, [1, 0, 2] : vector<8x4x8xf32> -> vector<4x8x8xf32>
    %c0_25 = arith.constant 0 : index
    %c0_26 = arith.constant 0 : index
    %c0_27 = arith.constant 0 : index
    %c0_28 = arith.constant 0 : index
    %31 = vector.load %arg11[%c0_25, %c0_26, %c0_27, %c0_28] : memref<1x4x8x8xf32, #tpu.memory_space<vmem>>, vector<1x4x8x8xf32>
    %32 = vector.shape_cast %31 : vector<1x4x8x8xf32> to vector<4x8x8xf32>
    %33 = vector.shape_cast %30 : vector<4x8x8xf32> to vector<1x4x8x8xf32>
    tpu.vector_store %arg11[%c0_25, %c0_26, %c0_27, %c0_28], %33 {strides = array<i32>} : memref<1x4x8x8xf32, #tpu.memory_space<vmem>>, vector<1x4x8x8xf32>,
    return
  }
  func.func @transform_0(%arg0: i32, %arg1: i32) -> (i32, i32, i32) {
    %c0_i32 = arith.constant 0 : i32
    %c0_i32_0 = arith.constant 0 : i32
    return %arg0, %arg1, %c0_i32 : i32, i32, i32
  }
  func.func @transform_1(%arg0: i32, %arg1: i32) -> (i32, i32) {
    %c0_i32 = arith.constant 0 : i32
    %c0_i32_0 = arith.constant 0 : i32
    %c0_i32_1 = arith.constant 0 : i32
    return %c0_i32, %c0_i32_0 : i32, i32
  }
  func.func @transform_2(%arg0: i32, %arg1: i32) -> (i32, i32) {
    %c0_i32 = arith.constant 0 : i32
    %c0_i32_0 = arith.constant 0 : i32
    %c0_i32_1 = arith.constant 0 : i32
    return %c0_i32, %c0_i32_0 : i32, i32
  }
  func.func @transform_3(%arg0: i32, %arg1: i32) -> (i32, i32) {
    %c0_i32 = arith.constant 0 : i32
    %c0_i32_0 = arith.constant 0 : i32
    %c0_i32_1 = arith.constant 0 : i32
    return %c0_i32, %c0_i32_0 : i32, i32
  }
  func.func @transform_4(%arg0: i32, %arg1: i32) -> (i32, i32) {
    %c0_i32 = arith.constant 0 : i32
    %c0_i32_0 = arith.constant 0 : i32
    %c0_i32_1 = arith.constant 0 : i32
    return %c0_i32, %c0_i32_0 : i32, i32
  }
  func.func @transform_5(%arg0: i32, %arg1: i32) -> (i32, i32) {
    %c0_i32 = arith.constant 0 : i32
    %c0_i32_0 = arith.constant 0 : i32
    %c0_i32_1 = arith.constant 0 : i32
    return %c0_i32, %c0_i32_0 : i32, i32
  }
  func.func @transform_6(%arg0: i32, %arg1: i32) -> (i32, i32) {
    %c0_i32 = arith.constant 0 : i32
    %c0_i32_0 = arith.constant 0 : i32
    %c0_i32_1 = arith.constant 0 : i32
    return %c0_i32, %c0_i32_0 : i32, i32
  }
  func.func @transform_7(%arg0: i32, %arg1: i32) -> (i32, i32, i32, i32) {
    %c0_i32 = arith.constant 0 : i32
    %c0_i32_0 = arith.constant 0 : i32
    %c0_i32_1 = arith.constant 0 : i32
    return %arg0, %c0_i32, %arg1, %c0_i32_0 : i32, i32, i32, i32
  }
  func.func @transform_8(%arg0: i32, %arg1: i32) -> (i32, i32, i32, i32) {
    %c0_i32 = arith.constant 0 : i32
    %c0_i32_0 = arith.constant 0 : i32
    %c0_i32_1 = arith.constant 0 : i32
    return %arg0, %c0_i32, %arg1, %c0_i32_0 : i32, i32, i32, i32
  }
  func.func @transform_9(%arg0: i32, %arg1: i32) -> (i32, i32, i32, i32) {
    %c0_i32 = arith.constant 0 : i32
    %c0_i32_0 = arith.constant 0 : i32
    %c0_i32_1 = arith.constant 0 : i32
    return %arg0, %c0_i32, %arg1, %c0_i32_0 : i32, i32, i32, i32
  }
}

</mosaic_0001>

<llo_original>
// kernel: tpu_custom_call.1
$region0: #{tpu_custom_call.1}
  #allocation0 [shape = 'u32[]', space=smem, size = 0x4, offset = 0x4, fixed_abs, tag = 'smem constant byte address 0x4 - core index']
  #allocation1 [shape = 'u32[72,128]{1,0:T(1,128)}', space=vmem, size = 0x9000, scoped, tag = 'internal scratch']
  %s0 = inlined_call_operand.hbm [shape: f32[8,128], index: 0, kind: input, shape index: {}]
  %s1 = inlined_call_operand.hbm [shape: f32[8,128], index: 1, kind: output, shape index: {}]
  %s2 = sld [smem:[#allocation0]]
  $region18: #{tpu_custom_call.1} parent=0
    _
  %s4 = ssub.s32 1, %s2
  %s5 = scalar_select 0, %s4, %s2
  $region1: #{tpu_custom_call.1} parent=0
    #allocation2 [shape = 'u8[4096]{0}', space=vmem, size = 0x1000, scoped, tag = 'input window, operand 0, single buffered']
    #allocation3 [shape = 's32[1]{0}', space=sflag, size = 0x4, scoped, tag = 'scoped memory for tpu_custom_call.1']
    #allocation4 [shape = 's32[1]{0}', space=sflag, size = 0x4, scoped, tag = 'scoped memory for tpu_custom_call.1']
    #allocation5 [shape = 'u8[4096]{0}', space=vmem, size = 0x1000, scoped, tag = 'output window, operand 0, single buffered']
    %6 = vsyncpa [#allocation3], 0
    %7 = vsyncpa [#allocation4], 0
    // Predicated region
    $region2: #{tpu_custom_call.1} parent=1 // pred_check
      _
    $region3: #{tpu_custom_call.1} parent=1 // pred_check_branch
      %9 = sbr.rel (0) target = $region5
    $region4: #{tpu_custom_call.1} parent=1 // pred_region
      %11 = vsyncadd [#allocation3], 0
      %s13 = sshll.u32 %s0, 4
      %s14 = int_to_ptr.hbm [resolvable:$true] %s13
      %s15 = sshll.u32 [#allocation2], 4
      %s16 = int_to_ptr.vmem [resolvable:$true] %s15
      %18 = dma.hbm_to_vmem [thread:$0]  %s14, 128, %s16, [#allocation3]
    $region5: #{tpu_custom_call.1} parent=1 // pred_fallthru
      _
    // Predicated region
    $region6: #{tpu_custom_call.1} parent=1 // pred_check
      _
    $region7: #{tpu_custom_call.1} parent=1 // pred_check_branch
      %20 = sbr.rel (0) target = $region9
    $region8: #{tpu_custom_call.1} parent=1 // pred_region
      %22 = dma.done [#allocation3], 128
    $region9: #{tpu_custom_call.1} parent=1 // pred_fallthru
      _
    %v23 = vld [vmem:[#allocation2] sm:$0xff]
    %24 = vst [vmem:[#allocation5] sm:$0xff] %v23
    // Predicated region
    $region10: #{tpu_custom_call.1} parent=1 // pred_check
      _
    $region11: #{tpu_custom_call.1} parent=1 // pred_check_branch
      %26 = sbr.rel (0) target = $region13
    $region12: #{tpu_custom_call.1} parent=1 // pred_region
      %28 = vsyncadd [#allocation4], 0
      %s30 = sshll.u32 [#allocation5], 4
      %s31 = int_to_ptr.vmem [resolvable:$true] %s30
      %s32 = sshll.u32 %s1, 4
      %s33 = int_to_ptr.hbm [resolvable:$true] %s32
      %35 = dma.vmem_to_hbm [thread:$0]  %s31, 128, %s33, [#allocation4]
    $region13: #{tpu_custom_call.1} parent=1 // pred_fallthru
      _
    // Predicated region
    $region14: #{tpu_custom_call.1} parent=1 // pred_check
      _
    $region15: #{tpu_custom_call.1} parent=1 // pred_check_branch
      %37 = sbr.rel (0) target = $region17
    $region16: #{tpu_custom_call.1} parent=1 // pred_region
      %39 = dma.done [#allocation4], 128
    $region17: #{tpu_custom_call.1} parent=1 // pred_fallthru
      _
    %40 = vsyncpa [#allocation3], 1
    %41 = vsyncpa [#allocation4], 1

// kernel: tpu_custom_call.1
$region0: #{tpu_custom_call.1}
  #allocation0 [shape = 'u32[]', space=smem, size = 0x4, offset = 0x4, fixed_abs, tag = 'smem constant byte address 0x4 - core index']
  #allocation1 [shape = 'u32[72,128]{1,0:T(1,128)}', space=vmem, size = 0x9000, scoped, tag = 'internal scratch']
  %s0 = inlined_call_operand.hbm [shape: f32[2,16,32], index: 0, kind: input, shape index: {}]
  %s1 = inlined_call_operand.hbm [shape: f32[32,32], index: 1, kind: input, shape index: {}]
  %s2 = inlined_call_operand.vmem [shape: f32[1,32], index: 2, kind: input, shape index: {}]
  %s3 = inlined_call_operand.hbm [shape: f32[32,32], index: 3, kind: input, shape index: {}]
  %s4 = inlined_call_operand.vmem [shape: f32[1,32], index: 4, kind: input, shape index: {}]
  %s5 = inlined_call_operand.hbm [shape: f32[32,32], index: 5, kind: input, shape index: {}]
  %s6 = inlined_call_operand.vmem [shape: f32[1,32], index: 6, kind: input, shape index: {}]
  %s7 = inlined_call_operand.vmem [shape: f32[2,4,16,8], index: 7, kind: output, shape index: {0}]
  %s8 = inlined_call_operand.vmem [shape: f32[2,4,16,8], index: 8, kind: output, shape index: {1}]
  %s9 = inlined_call_operand.vmem [shape: f32[2,4,16,8], index: 9, kind: output, shape index: {2}]
  %10 = xla_tuple %s7, %s8, %s9
  %s11 = sld [smem:[#allocation0]]
  $region195: #{tpu_custom_call.1} parent=0
    _
  %s13 = ssub.s32 1, %s11
  %s14 = scalar_select 0, %s13, %s11
  $region1: #{tpu_custom_call.1} parent=0
    #allocation2 [shape = 'u8[8192]{0}', space=vmem, size = 0x2000, scoped, tag = 'input window, operand 0']
    #allocation3 [shape = 's32[2]{0}', space=sflag, size = 0x8, scoped, tag = 'scoped memory for tpu_custom_call.1']
    #allocation4 [shape = 'u8[16384]{0}', space=vmem, size = 0x4000, scoped, tag = 'input window, operand 1, single buffered']
    #allocation5 [shape = 's32[1]{0}', space=sflag, size = 0x4, scoped, tag = 'scoped memory for tpu_custom_call.1']
    #allocation6 [shape = 'u8[16384]{0}', space=vmem, size = 0x4000, scoped, tag = 'input window, operand 3, single buffered']
    #allocation7 [shape = 'u8[16384]{0}', space=vmem, size = 0x4000, scoped, tag = 'input window, operand 5, single buffered']
    #allocation8 [shape = 's32[1]{0}', space=sflag, size = 0x4, scoped, tag = 'scoped memory for tpu_custom_call.1']
    #allocation9 [shape = 'u8[32768]{0}', space=vmem, size = 0x8000, scoped, tag = 'output window, operand 0']
    #allocation10 [shape = 'u8[32768]{0}', space=vmem, size = 0x8000, scoped, tag = 'output window, operand 1']
    #allocation11 [shape = 'u8[32768]{0}', space=vmem, size = 0x8000, scoped, tag = 'output window, operand 2']
    %15 = vsyncpa [#allocation3], 0
    %s16 = scalar_lea.sflag [#allocation3], 1
    %17 = vsyncpa %s16, 0
    %18 = vsyncpa [#allocation5], 0
    %19 = vsyncpa [#allocation8], 0
    loop: start=0, step=1, limit=6
    $region2: #{tpu_custom_call.1} parent=1 // loop_pre_header
      _
    $region3: #{tpu_custom_call.1} parent=1 // loop_header
      %s21 = sphi 0, %s25
      %p22 = scmp.ge.s32.totalorder %s21, 6
      %s28 = sphi 0, %s40
      %s29 = sphi 0, %s36
      %s30 = sphi 0, %s28
      %s31 = sphi 0, %s29
      %s32 = sphi 0, %s30
      %s33 = sphi 0, %s31
      %s45 = sphi 0, %s47
      %s48 = sphi 0, %s45
      %s49 = sphi 0, %s48
      %s65 = sphi 0, %s49
      %s69 = sphi 0, %s69
      %s71 = sphi 0, %s69
      %s72 = sphi 0, %s71
      %s86 = sphi 0, %s72
      %s90 = sphi 0, %s90
      %s92 = sphi 0, %s90
      %s93 = sphi 0, %s92
      %s107 = sphi 0, %s93
      %s111 = sphi 0, %s111
      %s113 = sphi 0, %s111
      %s114 = sphi 0, %s113
      %s128 = sphi 0, %s114
      %s132 = sphi 0, %s132
      %s134 = sphi 0, %s132
      %s135 = sphi 0, %s134
      %s149 = sphi 0, %s135
      %s153 = sphi 0, %s153
      %s155 = sphi 0, %s153
      %s156 = sphi 0, %s155
      %s170 = sphi 0, %s156
      %s174 = sphi 0, %s174
      %s176 = sphi 0, %s174
      %s177 = sphi 0, %s176
      %s191 = sphi 0, %s177
      %s199 = sphi 0, %s201
      %s202 = sphi 0, %s199
      %s203 = sphi 0, %s202
      %s219 = sphi 0, %s203
      %s227 = sphi 0, %s229
      %s230 = sphi 0, %s227
      %s231 = sphi 0, %s230
      %s247 = sphi 0, %s231
      %s255 = sphi 0, %s257
      %s258 = sphi 0, %s255
      %s259 = sphi 0, %s258
      %s275 = sphi 0, %s259
    $region4: #{tpu_custom_call.1} parent=1 // loop_header_branch
      %24 = sbr.rel (%p22) target = $region8
    $region5: #{tpu_custom_call.1} parent=1 // loop_body
      %s26 = ssub.s32 %s21, 1
      %s27 = ssub.s32 %s21, 2
      %s34 = sadd.s32 1, %s29
      %p35 = scmp.ge.s32.totalorder %s34, 2
      %s36 = scalar_select %p35, 0, %s34
      %s37 = sadd.s32 1, %s28
      %s38 = scalar_select %p35, %s37, %s28
      %p39 = scmp.ge.s32.totalorder %s38, 2
      %s40 = scalar_select %p39, 0, %s38
      %s41 = ssub.s32 %s28, %s40
      %s42 = ssub.s32 %s29, %s36
      %s43 = sor.u32 %s41, %s42
      %p44 = scmp.eq.s32.totalorder %s43, 0
      %s46 = sadd.s32 %s45, 1
      %s47 = scalar_select %p44, %s45, %s46
      %p50 = pneg %p44
      %p51 = scmp.eq.s32.totalorder %s21, 3
      %p52 = por %p50, %p51
      %p53 = scmp.ne.s32.totalorder %s45, %s48
      %p54 = scmp.eq.s32.totalorder %s21, 0
      %p55 = por %p53, %p54
      %p56 = scmp.ne.s32.totalorder %s45, %s48
      %p57 = scmp.eq.s32.totalorder %s26, 3
      %p58 = por %p56, %p57
      %p59 = scmp.ne.s32.totalorder %s48, %s49
      %p60 = scmp.eq.s32.totalorder %s26, 0
      %p61 = por %p59, %p60
      %p62 = scmp.ne.s32.totalorder %s48, %s49
      %p63 = scmp.eq.s32.totalorder %s27, 3
      %p64 = por %p62, %p63
      %p66 = scmp.ne.s32.totalorder %s49, %s65
      %p67 = scmp.eq.s32.totalorder %s27, 0
      %p68 = por %p66, %p67
      %s70 = sadd.s32 %s69, 1
      %p73 = scmp.eq.s32.totalorder %s21, 3
      %p74 = scmp.ne.s32.totalorder %s69, %s71
      %p75 = scmp.eq.s32.totalorder %s21, 0
      %p76 = por %p74, %p75
      %p77 = scmp.ne.s32.totalorder %s69, %s71
      %p78 = scmp.eq.s32.totalorder %s26, 3
      %p79 = por %p77, %p78
      %p80 = scmp.ne.s32.totalorder %s71, %s72
      %p81 = scmp.eq.s32.totalorder %s26, 0
      %p82 = por %p80, %p81
      %p83 = scmp.ne.s32.totalorder %s71, %s72
      %p84 = scmp.eq.s32.totalorder %s27, 3
      %p85 = por %p83, %p84
      %p87 = scmp.ne.s32.totalorder %s72, %s86
      %p88 = scmp.eq.s32.totalorder %s27, 0
      %p89 = por %p87, %p88
      %s91 = sadd.s32 %s90, 1
      %p94 = scmp.eq.s32.totalorder %s21, 3
      %p95 = scmp.ne.s32.totalorder %s90, %s92
      %p96 = scmp.eq.s32.totalorder %s21, 0
      %p97 = por %p95, %p96
      %p98 = scmp.ne.s32.totalorder %s90, %s92
      %p99 = scmp.eq.s32.totalorder %s26, 3
      %p100 = por %p98, %p99
      %p101 = scmp.ne.s32.totalorder %s92, %s93
      %p102 = scmp.eq.s32.totalorder %s26, 0
      %p103 = por %p101, %p102
      %p104 = scmp.ne.s32.totalorder %s92, %s93
      %p105 = scmp.eq.s32.totalorder %s27, 3
      %p106 = por %p104, %p105
      %p108 = scmp.ne.s32.totalorder %s93, %s107
      %p109 = scmp.eq.s32.totalorder %s27, 0
      %p110 = por %p108, %p109
      %s112 = sadd.s32 %s111, 1
      %p115 = scmp.eq.s32.totalorder %s21, 3
      %p116 = scmp.ne.s32.totalorder %s111, %s113
      %p117 = scmp.eq.s32.totalorder %s21, 0
      %p118 = por %p116, %p117
      %p119 = scmp.ne.s32.totalorder %s111, %s113
      %p120 = scmp.eq.s32.totalorder %s26, 3
      %p121 = por %p119, %p120
      %p122 = scmp.ne.s32.totalorder %s113, %s114
      %p123 = scmp.eq.s32.totalorder %s26, 0
      %p124 = por %p122, %p123
      %p125 = scmp.ne.s32.totalorder %s113, %s114
      %p126 = scmp.eq.s32.totalorder %s27, 3
      %p127 = por %p125, %p126
      %p129 = scmp.ne.s32.totalorder %s114, %s128
      %p130 = scmp.eq.s32.totalorder %s27, 0
      %p131 = por %p129, %p130
      %s133 = sadd.s32 %s132, 1
      %p136 = scmp.eq.s32.totalorder %s21, 3
      %p137 = scmp.ne.s32.totalorder %s132, %s134
      %p138 = scmp.eq.s32.totalorder %s21, 0
      %p139 = por %p137, %p138
      %p140 = scmp.ne.s32.totalorder %s132, %s134
      %p141 = scmp.eq.s32.totalorder %s26, 3
      %p142 = por %p140, %p141
      %p143 = scmp.ne.s32.totalorder %s134, %s135
      %p144 = scmp.eq.s32.totalorder %s26, 0
      %p145 = por %p143, %p144
      %p146 = scmp.ne.s32.totalorder %s134, %s135
      %p147 = scmp.eq.s32.totalorder %s27, 3
      %p148 = por %p146, %p147
      %p150 = scmp.ne.s32.totalorder %s135, %s149
      %p151 = scmp.eq.s32.totalorder %s27, 0
      %p152 = por %p150, %p151
      %s154 = sadd.s32 %s153, 1
      %p157 = scmp.eq.s32.totalorder %s21, 3
      %p158 = scmp.ne.s32.totalorder %s153, %s155
      %p159 = scmp.eq.s32.totalorder %s21, 0
      %p160 = por %p158, %p159
      %p161 = scmp.ne.s32.totalorder %s153, %s155
      %p162 = scmp.eq.s32.totalorder %s26, 3
      %p163 = por %p161, %p162
      %p164 = scmp.ne.s32.totalorder %s155, %s156
      %p165 = scmp.eq.s32.totalorder %s26, 0
      %p166 = por %p164, %p165
      %p167 = scmp.ne.s32.totalorder %s155, %s156
      %p168 = scmp.eq.s32.totalorder %s27, 3
      %p169 = por %p167, %p168
      %p171 = scmp.ne.s32.totalorder %s156, %s170
      %p172 = scmp.eq.s32.totalorder %s27, 0
      %p173 = por %p171, %p172
      %s175 = sadd.s32 %s174, 1
      %p178 = scmp.eq.s32.totalorder %s21, 3
      %p179 = scmp.ne.s32.totalorder %s174, %s176
      %p180 = scmp.eq.s32.totalorder %s21, 0
      %p181 = por %p179, %p180
      %p182 = scmp.ne.s32.totalorder %s174, %s176
      %p183 = scmp.eq.s32.totalorder %s26, 3
      %p184 = por %p182, %p183
      %p185 = scmp.ne.s32.totalorder %s176, %s177
      %p186 = scmp.eq.s32.totalorder %s26, 0
      %p187 = por %p185, %p186
      %p188 = scmp.ne.s32.totalorder %s176, %s177
      %p189 = scmp.eq.s32.totalorder %s27, 3
      %p190 = por %p188, %p189
      %p192 = scmp.ne.s32.totalorder %s177, %s191
      %p193 = scmp.eq.s32.totalorder %s27, 0
      %p194 = por %p192, %p193
      %s195 = ssub.s32 %s28, %s40
      %s196 = ssub.s32 %s29, %s36
      %s197 = sor.u32 %s195, %s196
      %p198 = scmp.eq.s32.totalorder %s197, 0
      %s200 = sadd.s32 %s199, 1
      %s201 = scalar_select %p198, %s199, %s200
      %p204 = pneg %p198
      %p205 = scmp.eq.s32.totalorder %s21, 3
      %p206 = por %p204, %p205
      %p207 = scmp.ne.s32.totalorder %s199, %s202
      %p208 = scmp.eq.s32.totalorder %s21, 0
      %p209 = por %p207, %p208
      %p210 = scmp.ne.s32.totalorder %s199, %s202
      %p211 = scmp.eq.s32.totalorder %s26, 3
      %p212 = por %p210, %p211
      %p213 = scmp.ne.s32.totalorder %s202, %s203
      %p214 = scmp.eq.s32.totalorder %s26, 0
      %p215 = por %p213, %p214
      %p216 = scmp.ne.s32.totalorder %s202, %s203
      %p217 = scmp.eq.s32.totalorder %s27, 3
      %p218 = por %p216, %p217
      %p220 = scmp.ne.s32.totalorder %s203, %s219
      %p221 = scmp.eq.s32.totalorder %s27, 0
      %p222 = por %p220, %p221
      %s223 = ssub.s32 %s28, %s40
      %s224 = ssub.s32 %s29, %s36
      %s225 = sor.u32 %s223, %s224
      %p226 = scmp.eq.s32.totalorder %s225, 0
      %s228 = sadd.s32 %s227, 1
      %s229 = scalar_select %p226, %s227, %s228
      %p232 = pneg %p226
      %p233 = scmp.eq.s32.totalorder %s21, 3
      %p234 = por %p232, %p233
      %p235 = scmp.ne.s32.totalorder %s227, %s230
      %p236 = scmp.eq.s32.totalorder %s21, 0
      %p237 = por %p235, %p236
      %p238 = scmp.ne.s32.totalorder %s227, %s230
      %p239 = scmp.eq.s32.totalorder %s26, 3
      %p240 = por %p238, %p239
      %p241 = scmp.ne.s32.totalorder %s230, %s231
      %p242 = scmp.eq.s32.totalorder %s26, 0
      %p243 = por %p241, %p242
      %p244 = scmp.ne.s32.totalorder %s230, %s231
      %p245 = scmp.eq.s32.totalorder %s27, 3
      %p246 = por %p244, %p245
      %p248 = scmp.ne.s32.totalorder %s231, %s247
      %p249 = scmp.eq.s32.totalorder %s27, 0
      %p250 = por %p248, %p249
      %s251 = ssub.s32 %s28, %s40
      %s252 = ssub.s32 %s29, %s36
      %s253 = sor.u32 %s251, %s252
      %p254 = scmp.eq.s32.totalorder %s253, 0
      %s256 = sadd.s32 %s255, 1
      %s257 = scalar_select %p254, %s255, %s256
      %p260 = pneg %p254
      %p261 = scmp.eq.s32.totalorder %s21, 3
      %p262 = por %p260, %p261
      %p263 = scmp.ne.s32.totalorder %s255, %s258
      %p264 = scmp.eq.s32.totalorder %s21, 0
      %p265 = por %p263, %p264
      %p266 = scmp.ne.s32.totalorder %s255, %s258
      %p267 = scmp.eq.s32.totalorder %s26, 3
      %p268 = por %p266, %p267
      %p269 = scmp.ne.s32.totalorder %s258, %s259
      %p270 = scmp.eq.s32.totalorder %s26, 0
      %p271 = por %p269, %p270
      %p272 = scmp.ne.s32.totalorder %s258, %s259
      %p273 = scmp.eq.s32.totalorder %s27, 3
      %p274 = por %p272, %p273
      %p276 = scmp.ne.s32.totalorder %s259, %s275
      %p277 = scmp.eq.s32.totalorder %s27, 0
      %p278 = por %p276, %p277
      %p279 = scmp.le.s32.totalorder 1, %s21
      %p280 = scmp.lt.s32.totalorder %s21, 5
      %p281 = pnand %p279, %p280
      %p282 = pneg %p281
      // Predicated region
      $region9: #{tpu_custom_call.1} parent=5 // pred_check
        _
      $region10: #{tpu_custom_call.1} parent=5 // pred_check_branch
        %284 = sbr.rel (%p281) target = $region12
      $region11: #{tpu_custom_call.1} parent=5 // pred_region
        %s285 = ssub.s32 %s21, 1
        // Predicated region
        $region13: #{tpu_custom_call.1} parent=11 // pred_check
          %p286 = pneg %p82
        $region14: #{tpu_custom_call.1} parent=11 // pred_check_branch
          %288 = sbr.rel (%p286) target = $region16
        $region15: #{tpu_custom_call.1} parent=11 // pred_region
          %290 = vsyncadd [#allocation5], 0
          %s291 = sshll.u32 %s1, 4
          %s292 = int_to_ptr.hbm [resolvable:$true] %s291
          %s293 = sshll.u32 [#allocation4], 4
          %s294 = int_to_ptr.vmem [resolvable:$true] %s293
          %299 = dma.hbm_to_vmem [thread:$0]  %s292, 512, %s294, [#allocation5], 128, 128, 8
        $region16: #{tpu_custom_call.1} parent=11 // pred_fallthru
          _
        // Predicated region
        $region17: #{tpu_custom_call.1} parent=11 // pred_check
          %p300 = pneg %p103
        $region18: #{tpu_custom_call.1} parent=11 // pred_check_branch
          %302 = sbr.rel (%p300) target = $region20
        $region19: #{tpu_custom_call.1} parent=11 // pred_region
          _
        $region20: #{tpu_custom_call.1} parent=11 // pred_fallthru
          _
        // Predicated region
        $region21: #{tpu_custom_call.1} parent=11 // pred_check
          %p303 = pneg %p124
        $region22: #{tpu_custom_call.1} parent=11 // pred_check_branch
          %305 = sbr.rel (%p303) target = $region24
        $region23: #{tpu_custom_call.1} parent=11 // pred_region
          %307 = vsyncadd [#allocation5], 0
          %s308 = sshll.u32 %s3, 4
          %s309 = int_to_ptr.hbm [resolvable:$true] %s308
          %s310 = sshll.u32 [#allocation6], 4
          %s311 = int_to_ptr.vmem [resolvable:$true] %s310
          %316 = dma.hbm_to_vmem [thread:$0]  %s309, 512, %s311, [#allocation5], 128, 128, 8
        $region24: #{tpu_custom_call.1} parent=11 // pred_fallthru
          _
        // Predicated region
        $region25: #{tpu_custom_call.1} parent=11 // pred_check
          %p317 = pneg %p145
        $region26: #{tpu_custom_call.1} parent=11 // pred_check_branch
          %319 = sbr.rel (%p317) target = $region28
        $region27: #{tpu_custom_call.1} parent=11 // pred_region
          _
        $region28: #{tpu_custom_call.1} parent=11 // pred_fallthru
          _
        // Predicated region
        $region29: #{tpu_custom_call.1} parent=11 // pred_check
          %p320 = pneg %p166
        $region30: #{tpu_custom_call.1} parent=11 // pred_check_branch
          %322 = sbr.rel (%p320) target = $region32
        $region31: #{tpu_custom_call.1} parent=11 // pred_region
          %324 = vsyncadd [#allocation8], 0
          %s325 = sshll.u32 %s5, 4
          %s326 = int_to_ptr.hbm [resolvable:$true] %s325
          %s327 = sshll.u32 [#allocation7], 4
          %s328 = int_to_ptr.vmem [resolvable:$true] %s327
          %333 = dma.hbm_to_vmem [thread:$0]  %s326, 512, %s328, [#allocation8], 128, 128, 8
        $region32: #{tpu_custom_call.1} parent=11 // pred_fallthru
          _
        // Predicated region
        $region33: #{tpu_custom_call.1} parent=11 // pred_check
          %p334 = pneg %p187
        $region34: #{tpu_custom_call.1} parent=11 // pred_check_branch
          %336 = sbr.rel (%p334) target = $region36
        $region35: #{tpu_custom_call.1} parent=11 // pred_region
          _
        $region36: #{tpu_custom_call.1} parent=11 // pred_fallthru
          _
      $region12: #{tpu_custom_call.1} parent=5 // pred_fallthru
        _
      %p337 = scmp.lt.s32.totalorder %s21, 4
      // Predicated region
      $region37: #{tpu_custom_call.1} parent=5 // pred_check
        %p338 = pneg %p337
      $region38: #{tpu_custom_call.1} parent=5 // pred_check_branch
        %340 = sbr.rel (%p338) target = $region40
      $region39: #{tpu_custom_call.1} parent=5 // pred_region
        // Predicated region
        $region41: #{tpu_custom_call.1} parent=39 // pred_check
          %p341 = pneg %p55
        $region42: #{tpu_custom_call.1} parent=39 // pred_check_branch
          %343 = sbr.rel (%p341) target = $region44
        $region43: #{tpu_custom_call.1} parent=39 // pred_region
          %s344 = sand.u32 %s45, 1
          %s345 = scalar_lea.sflag [#allocation3], %s344
          %s346 = sand.u32 %s45, 1
          %s347 = smul.addr %s346, 8
          %s348 = scalar_lea.vmem [#allocation2], %s347
          %350 = vsyncadd %s345, 0
          %s351 = smul.addr %s28, 2
          %s352 = sadd.s32 %s29, %s351
          %s353 = smul.addr %s352, 8
          %s354 = scalar_lea.hbm %s0, %s353
          %s356 = sshll.u32 %s354, 4
          %s357 = int_to_ptr.hbm [resolvable:$true] %s356
          %s358 = sshll.u32 %s348, 4
          %s359 = int_to_ptr.vmem [resolvable:$true] %s358
          %361 = dma.hbm_to_vmem [thread:$0]  %s357, 128, %s359, %s345
        $region44: #{tpu_custom_call.1} parent=39 // pred_fallthru
          _
      $region40: #{tpu_custom_call.1} parent=5 // pred_fallthru
        _
      %p362 = scmp.le.s32.totalorder 1, %s21
      %p363 = scmp.lt.s32.totalorder %s21, 5
      %p364 = pnand %p362, %p363
      %p365 = pneg %p364
      // Predicated region
      $region45: #{tpu_custom_call.1} parent=5 // pred_check
        _
      $region46: #{tpu_custom_call.1} parent=5 // pred_check_branch
        %367 = sbr.rel (%p364) target = $region48
      $region47: #{tpu_custom_call.1} parent=5 // pred_region
        %s368 = ssub.s32 %s21, 1
        %s369 = sand.u32 %s48, 1
        %s370 = scalar_lea.sflag [#allocation3], %s369
        %s371 = sand.u32 %s48, 1
        %s372 = smul.addr %s371, 8
        %s373 = scalar_lea.vmem [#allocation2], %s372
        // Predicated region
        $region49: #{tpu_custom_call.1} parent=47 // pred_check
          %p374 = pneg %p61
        $region50: #{tpu_custom_call.1} parent=47 // pred_check_branch
          %376 = sbr.rel (%p374) target = $region52
        $region51: #{tpu_custom_call.1} parent=47 // pred_region
          %378 = dma.done %s370, 128
        $region52: #{tpu_custom_call.1} parent=47 // pred_fallthru
          _
        // Predicated region
        $region53: #{tpu_custom_call.1} parent=47 // pred_check
          %p379 = pneg %p82
        $region54: #{tpu_custom_call.1} parent=47 // pred_check_branch
          %381 = sbr.rel (%p379) target = $region56
        $region55: #{tpu_custom_call.1} parent=47 // pred_region
          %383 = dma.done [#allocation5], 512
        $region56: #{tpu_custom_call.1} parent=47 // pred_fallthru
          _
        // Predicated region
        $region57: #{tpu_custom_call.1} parent=47 // pred_check
          %p384 = pneg %p124
        $region58: #{tpu_custom_call.1} parent=47 // pred_check_branch
          %386 = sbr.rel (%p384) target = $region60
        $region59: #{tpu_custom_call.1} parent=47 // pred_region
          %388 = dma.done [#allocation5], 512
        $region60: #{tpu_custom_call.1} parent=47 // pred_fallthru
          _
        // Predicated region
        $region61: #{tpu_custom_call.1} parent=47 // pred_check
          %p389 = pneg %p166
        $region62: #{tpu_custom_call.1} parent=47 // pred_check_branch
          %391 = sbr.rel (%p389) target = $region64
        $region63: #{tpu_custom_call.1} parent=47 // pred_region
          %393 = dma.done [#allocation8], 512
        $region64: #{tpu_custom_call.1} parent=47 // pred_fallthru
          _
        %s394 = sand.u32 %s48, 1
        %s395 = scalar_lea.sflag [#allocation3], %s394
        %s396 = sand.u32 %s48, 1
        %s397 = smul.addr %s396, 8
        %s398 = scalar_lea.vmem [#allocation2], %s397
        %p399 = pneg %p61
        %p400 = pneg %p58
        %p401 = pneg %p82
        %p402 = pneg %p79
        %p403 = pneg %p103
        %p404 = pneg %p100
        %p405 = pneg %p124
        %p406 = pneg %p121
        %p407 = pneg %p145
        %p408 = pneg %p142
        %p409 = pneg %p166
        %p410 = pneg %p163
        %p411 = pneg %p187
        %p412 = pneg %p184
        %p413 = pneg %p215
        %p414 = pneg %p212
        %s415 = sand.u32 %s202, 1
        %s416 = sand.u32 %s202, 1
        %s417 = smul.addr %s416, 32
        %s418 = scalar_lea.vmem [#allocation9], %s417
        %p419 = pneg %p243
        %p420 = pneg %p240
        %s421 = sand.u32 %s230, 1
        %s422 = sand.u32 %s230, 1
        %s423 = smul.addr %s422, 32
        %s424 = scalar_lea.vmem [#allocation10], %s423
        %p425 = pneg %p271
        %p426 = pneg %p268
        %s427 = sand.u32 %s258, 1
        %s428 = sand.u32 %s258, 1
        %s429 = smul.addr %s428, 32
        %s430 = scalar_lea.vmem [#allocation11], %s429
        %v431 = vld [vmem:[%s373] sm:$0xff]
        %v432 = vld [vmem:[#allocation4] sm:$0xff]
        %v433 = vld [vmem:[#allocation4 + $0x8] sm:$0xff]
        %v434 = vld [vmem:[#allocation4 + $0x10] sm:$0xff]
        %v435 = vld [vmem:[#allocation4 + $0x18] sm:$0xff]
        %v436 = vld [vmem:[%s2] sm:$0x1]
        %v438 = vperm.slane %v436, 0
        %vm440 = vcmask 261120
        %v442 = vsel %vm440, %v431, 0
        %444 = vmatpush.msra.mxu0 0.0
        %445 = vmatpush.msra.mxu0 0.0
        %446 = vmatpush.msra.mxu0 0.0
        %447 = vmatpush.msra.mxu0 0.0
        %448 = vmatpush.msra.mxu0 0.0
        %449 = vmatpush.msra.mxu0 0.0
        %450 = vmatpush.msra.mxu0 0.0
        %451 = vmatpush.msra.mxu0 0.0
        %452 = vmatpush.msra.mxu0 0.0
        %453 = vmatpush.msra.mxu0 0.0
        %454 = vmatpush.msra.mxu0 0.0
        %455 = vmatpush.msra.mxu0 0.0
        %456 = vmatpush.msra.mxu0 %v435
        %457 = vmatpush.msra.mxu0 %v434
        %458 = vmatpush.msra.mxu0 %v433
        %459 = vmatpush.msra.mxu0 %v432
        %460 = vmatmul.f32.gmra.mxu0 %v442
        %v461 = vpop.f32.mrf.mxu0
        %v462 = vadd.f32 %v438, %v461
        %463 = vdwg.mxu0
        %v464 = vmul.f32 %v462, 0.5100697
        %v465 = vld [vmem:[#allocation6] sm:$0xff]
        %v466 = vld [vmem:[#allocation6 + $0x8] sm:$0xff]
        %v467 = vld [vmem:[#allocation6 + $0x10] sm:$0xff]
        %v468 = vld [vmem:[#allocation6 + $0x18] sm:$0xff]
        %v469 = vld [vmem:[%s4] sm:$0x1]
        %v471 = vperm.slane %v469, 0
        %473 = vmatpush.msra.mxu0 0.0
        %474 = vmatpush.msra.mxu0 0.0
        %475 = vmatpush.msra.mxu0 0.0
        %476 = vmatpush.msra.mxu0 0.0
        %477 = vmatpush.msra.mxu0 0.0
        %478 = vmatpush.msra.mxu0 0.0
        %479 = vmatpush.msra.mxu0 0.0
        %480 = vmatpush.msra.mxu0 0.0
        %481 = vmatpush.msra.mxu0 0.0
        %482 = vmatpush.msra.mxu0 0.0
        %483 = vmatpush.msra.mxu0 0.0
        %484 = vmatpush.msra.mxu0 0.0
        %485 = vmatpush.msra.mxu0 %v468
        %486 = vmatpush.msra.mxu0 %v467
        %487 = vmatpush.msra.mxu0 %v466
        %488 = vmatpush.msra.mxu0 %v465
        %489 = vmatmul.f32.gmra.mxu0 %v442
        %v490 = vpop.f32.mrf.mxu0
        %v491 = vadd.f32 %v471, %v490
        %492 = vdwg.mxu0
        %v493 = vld [vmem:[#allocation7] sm:$0xff]
        %v494 = vld [vmem:[#allocation7 + $0x8] sm:$0xff]
        %v495 = vld [vmem:[#allocation7 + $0x10] sm:$0xff]
        %v496 = vld [vmem:[#allocation7 + $0x18] sm:$0xff]
        %v497 = vld [vmem:[%s6] sm:$0x1]
        %v499 = vperm.slane %v497, 0
        %501 = vmatpush.msra.mxu0 0.0
        %502 = vmatpush.msra.mxu0 0.0
        %503 = vmatpush.msra.mxu0 0.0
        %504 = vmatpush.msra.mxu0 0.0
        %505 = vmatpush.msra.mxu0 0.0
        %506 = vmatpush.msra.mxu0 0.0
        %507 = vmatpush.msra.mxu0 0.0
        %508 = vmatpush.msra.mxu0 0.0
        %509 = vmatpush.msra.mxu0 0.0
        %510 = vmatpush.msra.mxu0 0.0
        %511 = vmatpush.msra.mxu0 0.0
        %512 = vmatpush.msra.mxu0 0.0
        %513 = vmatpush.msra.mxu0 %v496
        %514 = vmatpush.msra.mxu0 %v495
        %515 = vmatpush.msra.mxu0 %v494
        %516 = vmatpush.msra.mxu0 %v493
        %517 = vmatmul.f32.gmra.mxu0 %v442
        %v518 = vpop.f32.mrf.mxu0
        %v519 = vadd.f32 %v499, %v518
        %520 = vdwg.mxu0
        %522 = vrot.lane.b32.xlu0 %v464, 120
        %v523 = vpop.permute.xlu0 %522
        %525 = vrot.lane.b32.xlu0 %v464, 112
        %v526 = vpop.permute.xlu0 %525
        %528 = vrot.lane.b32.xlu0 %v464, 104
        %v529 = vpop.permute.xlu0 %528
        %v531 = vrot.slane %v526, 4
        %vm532 = vcmask 1047556
        %v533 = vsel %vm532, %v531, %v464
        %v534 = vrot.slane %v464, 4
        %v535 = vsel %vm532, %v526, %v534
        %v537 = vunpack.c.l.s4 1983009808
        %v538 = vunpack.c.0.s8 %v537
        %v539 = vperm.slane %v533, %v538
        %v541 = vunpack.c.l.s4 1983009808
        %v542 = vunpack.c.0.s8 %v541
        %v543 = vperm.slane %v535, %v542
        %v544 = vrot.slane %v529, 4
        %v545 = vsel %vm532, %v544, %v523
        %v546 = vrot.slane %v523, 4
        %v547 = vsel %vm532, %v529, %v546
        %v549 = vunpack.c.l.s4 1983009808
        %v550 = vunpack.c.0.s8 %v549
        %v551 = vperm.slane %v545, %v550
        %v553 = vunpack.c.l.s4 1983009808
        %v554 = vunpack.c.0.s8 %v553
        %v555 = vperm.slane %v547, %v554
        %v556 = vrot.slane %v551, 4
        %v557 = vsel %vm532, %v556, %v539
        %v558 = vrot.slane %v539, 4
        %v559 = vsel %vm532, %v551, %v558
        %v561 = vunpack.c.l.s4 1934713408
        %v562 = vunpack.c.0.s8 %v561
        %v563 = vperm.slane %v557, %v562
        %v565 = vunpack.c.l.s4 1934713408
        %v566 = vunpack.c.0.s8 %v565
        %v567 = vperm.slane %v559, %v566
        %v568 = vrot.slane %v555, 4
        %v569 = vsel %vm532, %v568, %v543
        %v570 = vrot.slane %v543, 4
        %v571 = vsel %vm532, %v555, %v570
        %v573 = vunpack.c.l.s4 1934713408
        %v574 = vunpack.c.0.s8 %v573
        %v575 = vperm.slane %v569, %v574
        %v577 = vunpack.c.l.s4 1934713408
        %v578 = vunpack.c.0.s8 %v577
        %v579 = vperm.slane %v571, %v578
        %v580 = vrot.slane %v563, 4
        %v581 = vsel %vm532, 0.0, %v580
        %v582 = vrot.slane %v567, 4
        %v583 = vsel %vm532, 0.0, %v582
        %v584 = vrot.slane %v575, 4
        %v585 = vsel %vm532, 0.0, %v584
        %v586 = vrot.slane %v579, 4
        %v587 = vsel %vm532, 0.0, %v586
        %v588 = vsel %vm532, %v582, %v563
        %v590 = vunpack.c.l.s4 1983009808
        %v591 = vunpack.c.0.s8 %v590
        %v592 = vperm.slane %v588, %v591
        %v593 = vrot.slane %v583, 4
        %v594 = vsel %vm532, %v593, %v581
        %v596 = vunpack.c.l.s4 1983009808
        %v597 = vunpack.c.0.s8 %v596
        %v598 = vperm.slane %v594, %v597
        %v599 = vsel %vm532, %v586, %v575
        %v601 = vunpack.c.l.s4 1983009808
        %v602 = vunpack.c.0.s8 %v601
        %v603 = vperm.slane %v599, %v602
        %v604 = vrot.slane %v587, 4
        %v605 = vsel %vm532, %v604, %v585
        %v607 = vunpack.c.l.s4 1983009808
        %v608 = vunpack.c.0.s8 %v607
        %v609 = vperm.slane %v605, %v608
        %v610 = vrot.slane %v598, 4
        %v611 = vsel %vm532, %v610, %v592
        %v612 = vrot.slane %v592, 4
        %v613 = vsel %vm532, %v598, %v612
        %v615 = vunpack.c.l.s4 1934713408
        %v616 = vunpack.c.0.s8 %v615
        %v617 = vperm.slane %v611, %v616
        %v619 = vunpack.c.l.s4 1934713408
        %v620 = vunpack.c.0.s8 %v619
        %v621 = vperm.slane %v613, %v620
        %v622 = vrot.slane %v609, 4
        %v623 = vsel %vm532, %v622, %v603
        %v624 = vrot.slane %v603, 4
        %v625 = vsel %vm532, %v609, %v624
        %v627 = vunpack.c.l.s4 1934713408
        %v628 = vunpack.c.0.s8 %v627
        %v629 = vperm.slane %v623, %v628
        %v631 = vunpack.c.l.s4 1934713408
        %v632 = vunpack.c.0.s8 %v631
        %v633 = vperm.slane %v625, %v632
        %v634 = vrot.slane %v629, 4
        %v635 = vsel %vm532, %v634, %v617
        %v636 = vrot.slane %v617, 4
        %v637 = vsel %vm532, %v629, %v636
        %v638 = vrot.slane %v633, 4
        %v639 = vsel %vm532, %v638, %v621
        %v640 = vrot.slane %v621, 4
        %v641 = vsel %vm532, %v633, %v640
        %vm642 = vcmask 64512
        %643 = vst.msk [vmem:[%s418] sm:$0xff] %vm642, %v635
        %644 = vst.msk [vmem:[%s418 + $0x8] sm:$0xff] %vm642, %v637
        %645 = vst.msk [vmem:[%s418 + $0x10] sm:$0xff] %vm642, %v639
        %646 = vst.msk [vmem:[%s418 + $0x18] sm:$0xff] %vm642, %v641
        %648 = vrot.lane.b32.xlu0 %v491, 120
        %v649 = vpop.permute.xlu0 %648
        %651 = vrot.lane.b32.xlu0 %v491, 112
        %v652 = vpop.permute.xlu0 %651
        %654 = vrot.lane.b32.xlu0 %v491, 104
        %v655 = vpop.permute.xlu0 %654
        %v657 = vrot.slane %v652, 4
        %v658 = vsel %vm532, %v657, %v491
        %v659 = vrot.slane %v491, 4
        %v660 = vsel %vm532, %v652, %v659
        %v662 = vunpack.c.l.s4 1983009808
        %v663 = vunpack.c.0.s8 %v662
        %v664 = vperm.slane %v658, %v663
        %v666 = vunpack.c.l.s4 1983009808
        %v667 = vunpack.c.0.s8 %v666
        %v668 = vperm.slane %v660, %v667
        %v669 = vrot.slane %v655, 4
        %v670 = vsel %vm532, %v669, %v649
        %v671 = vrot.slane %v649, 4
        %v672 = vsel %vm532, %v655, %v671
        %v674 = vunpack.c.l.s4 1983009808
        %v675 = vunpack.c.0.s8 %v674
        %v676 = vperm.slane %v670, %v675
        %v678 = vunpack.c.l.s4 1983009808
        %v679 = vunpack.c.0.s8 %v678
        %v680 = vperm.slane %v672, %v679
        %v681 = vrot.slane %v676, 4
        %v682 = vsel %vm532, %v681, %v664
        %v683 = vrot.slane %v664, 4
        %v684 = vsel %vm532, %v676, %v683
        %v686 = vunpack.c.l.s4 1934713408
        %v687 = vunpack.c.0.s8 %v686
        %v688 = vperm.slane %v682, %v687
        %v690 = vunpack.c.l.s4 1934713408
        %v691 = vunpack.c.0.s8 %v690
        %v692 = vperm.slane %v684, %v691
        %v693 = vrot.slane %v680, 4
        %v694 = vsel %vm532, %v693, %v668
        %v695 = vrot.slane %v668, 4
        %v696 = vsel %vm532, %v680, %v695
        %v698 = vunpack.c.l.s4 1934713408
        %v699 = vunpack.c.0.s8 %v698
        %v700 = vperm.slane %v694, %v699
        %v702 = vunpack.c.l.s4 1934713408
        %v703 = vunpack.c.0.s8 %v702
        %v704 = vperm.slane %v696, %v703
        %v705 = vrot.slane %v688, 4
        %v706 = vsel %vm532, 0.0, %v705
        %v707 = vrot.slane %v692, 4
        %v708 = vsel %vm532, 0.0, %v707
        %v709 = vrot.slane %v700, 4
        %v710 = vsel %vm532, 0.0, %v709
        %v711 = vrot.slane %v704, 4
        %v712 = vsel %vm532, 0.0, %v711
        %v713 = vsel %vm532, %v707, %v688
        %v715 = vunpack.c.l.s4 1983009808
        %v716 = vunpack.c.0.s8 %v715
        %v717 = vperm.slane %v713, %v716
        %v718 = vrot.slane %v708, 4
        %v719 = vsel %vm532, %v718, %v706
        %v721 = vunpack.c.l.s4 1983009808
        %v722 = vunpack.c.0.s8 %v721
        %v723 = vperm.slane %v719, %v722
        %v724 = vsel %vm532, %v711, %v700
        %v726 = vunpack.c.l.s4 1983009808
        %v727 = vunpack.c.0.s8 %v726
        %v728 = vperm.slane %v724, %v727
        %v729 = vrot.slane %v712, 4
        %v730 = vsel %vm532, %v729, %v710
        %v732 = vunpack.c.l.s4 1983009808
        %v733 = vunpack.c.0.s8 %v732
        %v734 = vperm.slane %v730, %v733
        %v735 = vrot.slane %v723, 4
        %v736 = vsel %vm532, %v735, %v717
        %v737 = vrot.slane %v717, 4
        %v738 = vsel %vm532, %v723, %v737
        %v740 = vunpack.c.l.s4 1934713408
        %v741 = vunpack.c.0.s8 %v740
        %v742 = vperm.slane %v736, %v741
        %v744 = vunpack.c.l.s4 1934713408
        %v745 = vunpack.c.0.s8 %v744
        %v746 = vperm.slane %v738, %v745
        %v747 = vrot.slane %v734, 4
        %v748 = vsel %vm532, %v747, %v728
        %v749 = vrot.slane %v728, 4
        %v750 = vsel %vm532, %v734, %v749
        %v752 = vunpack.c.l.s4 1934713408
        %v753 = vunpack.c.0.s8 %v752
        %v754 = vperm.slane %v748, %v753
        %v756 = vunpack.c.l.s4 1934713408
        %v757 = vunpack.c.0.s8 %v756
        %v758 = vperm.slane %v750, %v757
        %v759 = vrot.slane %v754, 4
        %v760 = vsel %vm532, %v759, %v742
        %v761 = vrot.slane %v742, 4
        %v762 = vsel %vm532, %v754, %v761
        %v763 = vrot.slane %v758, 4
        %v764 = vsel %vm532, %v763, %v746
        %v765 = vrot.slane %v746, 4
        %v766 = vsel %vm532, %v758, %v765
        %767 = vst.msk [vmem:[%s424] sm:$0xff] %vm642, %v760
        %768 = vst.msk [vmem:[%s424 + $0x8] sm:$0xff] %vm642, %v762
        %769 = vst.msk [vmem:[%s424 + $0x10] sm:$0xff] %vm642, %v764
        %770 = vst.msk [vmem:[%s424 + $0x18] sm:$0xff] %vm642, %v766
        %772 = vrot.lane.b32.xlu0 %v519, 120
        %v773 = vpop.permute.xlu0 %772
        %775 = vrot.lane.b32.xlu0 %v519, 112
        %v776 = vpop.permute.xlu0 %775
        %778 = vrot.lane.b32.xlu0 %v519, 104
        %v779 = vpop.permute.xlu0 %778
        %v781 = vrot.slane %v776, 4
        %v782 = vsel %vm532, %v781, %v519
        %v783 = vrot.slane %v519, 4
        %v784 = vsel %vm532, %v776, %v783
        %v786 = vunpack.c.l.s4 1983009808
        %v787 = vunpack.c.0.s8 %v786
        %v788 = vperm.slane %v782, %v787
        %v790 = vunpack.c.l.s4 1983009808
        %v791 = vunpack.c.0.s8 %v790
        %v792 = vperm.slane %v784, %v791
        %v793 = vrot.slane %v779, 4
        %v794 = vsel %vm532, %v793, %v773
        %v795 = vrot.slane %v773, 4
        %v796 = vsel %vm532, %v779, %v795
        %v798 = vunpack.c.l.s4 1983009808
        %v799 = vunpack.c.0.s8 %v798
        %v800 = vperm.slane %v794, %v799
        %v802 = vunpack.c.l.s4 1983009808
        %v803 = vunpack.c.0.s8 %v802
        %v804 = vperm.slane %v796, %v803
        %v805 = vrot.slane %v800, 4
        %v806 = vsel %vm532, %v805, %v788
        %v807 = vrot.slane %v788, 4
        %v808 = vsel %vm532, %v800, %v807
        %v810 = vunpack.c.l.s4 1934713408
        %v811 = vunpack.c.0.s8 %v810
        %v812 = vperm.slane %v806, %v811
        %v814 = vunpack.c.l.s4 1934713408
        %v815 = vunpack.c.0.s8 %v814
        %v816 = vperm.slane %v808, %v815
        %v817 = vrot.slane %v804, 4
        %v818 = vsel %vm532, %v817, %v792
        %v819 = vrot.slane %v792, 4
        %v820 = vsel %vm532, %v804, %v819
        %v822 = vunpack.c.l.s4 1934713408
        %v823 = vunpack.c.0.s8 %v822
        %v824 = vperm.slane %v818, %v823
        %v826 = vunpack.c.l.s4 1934713408
        %v827 = vunpack.c.0.s8 %v826
        %v828 = vperm.slane %v820, %v827
        %v829 = vrot.slane %v812, 4
        %v830 = vsel %vm532, 0.0, %v829
        %v831 = vrot.slane %v816, 4
        %v832 = vsel %vm532, 0.0, %v831
        %v833 = vrot.slane %v824, 4
        %v834 = vsel %vm532, 0.0, %v833
        %v835 = vrot.slane %v828, 4
        %v836 = vsel %vm532, 0.0, %v835
        %v837 = vsel %vm532, %v831, %v812
        %v839 = vunpack.c.l.s4 1983009808
        %v840 = vunpack.c.0.s8 %v839
        %v841 = vperm.slane %v837, %v840
        %v842 = vrot.slane %v832, 4
        %v843 = vsel %vm532, %v842, %v830
        %v845 = vunpack.c.l.s4 1983009808
        %v846 = vunpack.c.0.s8 %v845
        %v847 = vperm.slane %v843, %v846
        %v848 = vsel %vm532, %v835, %v824
        %v850 = vunpack.c.l.s4 1983009808
        %v851 = vunpack.c.0.s8 %v850
        %v852 = vperm.slane %v848, %v851
        %v853 = vrot.slane %v836, 4
        %v854 = vsel %vm532, %v853, %v834
        %v856 = vunpack.c.l.s4 1983009808
        %v857 = vunpack.c.0.s8 %v856
        %v858 = vperm.slane %v854, %v857
        %v859 = vrot.slane %v847, 4
        %v860 = vsel %vm532, %v859, %v841
        %v861 = vrot.slane %v841, 4
        %v862 = vsel %vm532, %v847, %v861
        %v864 = vunpack.c.l.s4 1934713408
        %v865 = vunpack.c.0.s8 %v864
        %v866 = vperm.slane %v860, %v865
        %v868 = vunpack.c.l.s4 1934713408
        %v869 = vunpack.c.0.s8 %v868
        %v870 = vperm.slane %v862, %v869
        %v871 = vrot.slane %v858, 4
        %v872 = vsel %vm532, %v871, %v852
        %v873 = vrot.slane %v852, 4
        %v874 = vsel %vm532, %v858, %v873
        %v876 = vunpack.c.l.s4 1934713408
        %v877 = vunpack.c.0.s8 %v876
        %v878 = vperm.slane %v872, %v877
        %v880 = vunpack.c.l.s4 1934713408
        %v881 = vunpack.c.0.s8 %v880
        %v882 = vperm.slane %v874, %v881
        %v883 = vrot.slane %v878, 4
        %v884 = vsel %vm532, %v883, %v866
        %v885 = vrot.slane %v866, 4
        %v886 = vsel %vm532, %v878, %v885
        %v887 = vrot.slane %v882, 4
        %v888 = vsel %vm532, %v887, %v870
        %v889 = vrot.slane %v870, 4
        %v890 = vsel %vm532, %v882, %v889
        %891 = vst.msk [vmem:[%s430] sm:$0xff] %vm642, %v884
        %892 = vst.msk [vmem:[%s430 + $0x8] sm:$0xff] %vm642, %v886
        %893 = vst.msk [vmem:[%s430 + $0x10] sm:$0xff] %vm642, %v888
        %894 = vst.msk [vmem:[%s430 + $0x18] sm:$0xff] %vm642, %v890
        %s895 = sand.u32 %s202, 1
        %s896 = sand.u32 %s202, 1
        %s897 = smul.addr %s896, 32
        %s898 = scalar_lea.vmem [#allocation9], %s897
        %s899 = sand.u32 %s230, 1
        %s900 = sand.u32 %s230, 1
        %s901 = smul.addr %s900, 32
        %s902 = scalar_lea.vmem [#allocation10], %s901
        %s903 = sand.u32 %s258, 1
        %s904 = sand.u32 %s258, 1
        %s905 = smul.addr %s904, 32
        %s906 = scalar_lea.vmem [#allocation11], %s905
        // Predicated region
        $region65: #{tpu_custom_call.1} parent=47 // pred_check
          %p907 = pneg %p212
        $region66: #{tpu_custom_call.1} parent=47 // pred_check_branch
          %909 = sbr.rel (%p907) target = $region68
        $region67: #{tpu_custom_call.1} parent=47 // pred_region
          %s910 = smul.addr %s30, 8
          %s911 = sadd.s32 %s31, %s910
          %s912 = smul.addr %s911, 8
          %s913 = scalar_lea.vmem %s7, %s912
          // Predicated region
          $region69: #{tpu_custom_call.1} parent=67 // pred_check
            _
          $region70: #{tpu_custom_call.1} parent=67 // pred_check_branch
            %915 = sbr.rel (0) target = $region72
          $region71: #{tpu_custom_call.1} parent=67 // pred_region
            // Predicated region
            $region73: #{tpu_custom_call.1} parent=71 // pred_check
              _
            $region74: #{tpu_custom_call.1} parent=71 // pred_check_branch
              %917 = sbr.rel (0) target = $region76
            $region75: #{tpu_custom_call.1} parent=71 // pred_region
              // Predicated region
              $region88: #{tpu_custom_call.1} parent=75 // pred_check
                _
              $region89: #{tpu_custom_call.1} parent=75 // pred_check_branch
                %939 = sbr.rel (0) target = $region91
              $region90: #{tpu_custom_call.1} parent=75 // pred_region
                loop: start=0, step=1, limit=1
                $region92: #{tpu_custom_call.1} parent=90 // loop_pre_header
                  _
                $region93: #{tpu_custom_call.1} parent=90 // loop_header
                  %s941 = sphi 0, %s945
                  %p942 = scmp.ge.s32.totalorder %s941, 1
                  %s946 = sphi %s898, %s898
                  %s947 = sphi %s913, %s913
                $region94: #{tpu_custom_call.1} parent=90 // loop_header_branch
                  %944 = sbr.rel (%p942) target = $region98
                $region95: #{tpu_custom_call.1} parent=90 // loop_body
                  %v948 = vld [vmem:[%s946] sm:$0xff]
                  %949 = vst [vmem:[%s947] sm:$0xff] %v948
                  %v950 = vld [vmem:[%s946 + $0x8] sm:$0xff]
                  %951 = vst [vmem:[%s947 + $0x10] sm:$0xff] %v950
                  %v952 = vld [vmem:[%s946 + $0x10] sm:$0xff]
                  %953 = vst [vmem:[%s947 + $0x20] sm:$0xff] %v952
                  %v954 = vld [vmem:[%s946 + $0x18] sm:$0xff]
                  %955 = vst [vmem:[%s947 + $0x30] sm:$0xff] %v954
                $region96: #{tpu_custom_call.1} parent=90 // loop_footer
                  %s945 = sadd.s32 1, %s941
                $region97: #{tpu_custom_call.1} parent=90 // loop_footer_branch
                  %940 = sbr.rel target = $region93
                $region98: #{tpu_custom_call.1} parent=90 // loop_exit
                  _
              $region91: #{tpu_custom_call.1} parent=75 // pred_fallthru
                _
              // Predicated region
              $region99: #{tpu_custom_call.1} parent=75 // pred_check
                _
              $region100: #{tpu_custom_call.1} parent=75 // pred_check_branch
                %957 = sbr.rel target = $region102
              $region101: #{tpu_custom_call.1} parent=75 // pred_region
                _
              $region102: #{tpu_custom_call.1} parent=75 // pred_fallthru
                _
            $region76: #{tpu_custom_call.1} parent=71 // pred_fallthru
              _
            // Predicated region
            $region77: #{tpu_custom_call.1} parent=71 // pred_check
              _
            $region78: #{tpu_custom_call.1} parent=71 // pred_check_branch
              %919 = sbr.rel target = $region80
            $region79: #{tpu_custom_call.1} parent=71 // pred_region
              %s921 = ssub.s32 256, 1
              loop: start=0, step=1, limit=1
              $region81: #{tpu_custom_call.1} parent=79 // loop_pre_header
                _
              $region82: #{tpu_custom_call.1} parent=79 // loop_header
                %s923 = sphi 0, %s927
                %p924 = scmp.ge.s32.totalorder %s923, 1
                %s928 = sphi %s898, %s898
                %s929 = sphi %s913, %s913
              $region83: #{tpu_custom_call.1} parent=79 // loop_header_branch
                %926 = sbr.rel (%p924) target = $region87
              $region84: #{tpu_custom_call.1} parent=79 // loop_body
                %v930 = vld [vmem:[%s928] sm:%s921]
                %931 = vst [vmem:[%s929] sm:%s921] %v930
                %v932 = vld [vmem:[%s928 + $0x8] sm:%s921]
                %933 = vst [vmem:[%s929 + $0x10] sm:%s921] %v932
                %v934 = vld [vmem:[%s928 + $0x10] sm:%s921]
                %935 = vst [vmem:[%s929 + $0x20] sm:%s921] %v934
                %v936 = vld [vmem:[%s928 + $0x18] sm:%s921]
                %937 = vst [vmem:[%s929 + $0x30] sm:%s921] %v936
              $region85: #{tpu_custom_call.1} parent=79 // loop_footer
                %s927 = sadd.s32 1, %s923
              $region86: #{tpu_custom_call.1} parent=79 // loop_footer_branch
                %922 = sbr.rel target = $region82
              $region87: #{tpu_custom_call.1} parent=79 // loop_exit
                _
            $region80: #{tpu_custom_call.1} parent=71 // pred_fallthru
              _
          $region72: #{tpu_custom_call.1} parent=67 // pred_fallthru
            _
          %958 = vnop
        $region68: #{tpu_custom_call.1} parent=47 // pred_fallthru
          _
        // Predicated region
        $region103: #{tpu_custom_call.1} parent=47 // pred_check
          %p959 = pneg %p240
        $region104: #{tpu_custom_call.1} parent=47 // pred_check_branch
          %961 = sbr.rel (%p959) target = $region106
        $region105: #{tpu_custom_call.1} parent=47 // pred_region
          %s962 = smul.addr %s30, 8
          %s963 = sadd.s32 %s31, %s962
          %s964 = smul.addr %s963, 8
          %s965 = scalar_lea.vmem %s8, %s964
          // Predicated region
          $region107: #{tpu_custom_call.1} parent=105 // pred_check
            _
          $region108: #{tpu_custom_call.1} parent=105 // pred_check_branch
            %967 = sbr.rel (0) target = $region110
          $region109: #{tpu_custom_call.1} parent=105 // pred_region
            // Predicated region
            $region111: #{tpu_custom_call.1} parent=109 // pred_check
              _
            $region112: #{tpu_custom_call.1} parent=109 // pred_check_branch
              %969 = sbr.rel (0) target = $region114
            $region113: #{tpu_custom_call.1} parent=109 // pred_region
              // Predicated region
              $region126: #{tpu_custom_call.1} parent=113 // pred_check
                _
              $region127: #{tpu_custom_call.1} parent=113 // pred_check_branch
                %991 = sbr.rel (0) target = $region129
              $region128: #{tpu_custom_call.1} parent=113 // pred_region
                loop: start=0, step=1, limit=1
                $region130: #{tpu_custom_call.1} parent=128 // loop_pre_header
                  _
                $region131: #{tpu_custom_call.1} parent=128 // loop_header
                  %s993 = sphi 0, %s997
                  %p994 = scmp.ge.s32.totalorder %s993, 1
                  %s998 = sphi %s902, %s902
                  %s999 = sphi %s965, %s965
                $region132: #{tpu_custom_call.1} parent=128 // loop_header_branch
                  %996 = sbr.rel (%p994) target = $region136
                $region133: #{tpu_custom_call.1} parent=128 // loop_body
                  %v1000 = vld [vmem:[%s998] sm:$0xff]
                  %1001 = vst [vmem:[%s999] sm:$0xff] %v1000
                  %v1002 = vld [vmem:[%s998 + $0x8] sm:$0xff]
                  %1003 = vst [vmem:[%s999 + $0x10] sm:$0xff] %v1002
                  %v1004 = vld [vmem:[%s998 + $0x10] sm:$0xff]
                  %1005 = vst [vmem:[%s999 + $0x20] sm:$0xff] %v1004
                  %v1006 = vld [vmem:[%s998 + $0x18] sm:$0xff]
                  %1007 = vst [vmem:[%s999 + $0x30] sm:$0xff] %v1006
                $region134: #{tpu_custom_call.1} parent=128 // loop_footer
                  %s997 = sadd.s32 1, %s993
                $region135: #{tpu_custom_call.1} parent=128 // loop_footer_branch
                  %992 = sbr.rel target = $region131
                $region136: #{tpu_custom_call.1} parent=128 // loop_exit
                  _
              $region129: #{tpu_custom_call.1} parent=113 // pred_fallthru
                _
              // Predicated region
              $region137: #{tpu_custom_call.1} parent=113 // pred_check
                _
              $region138: #{tpu_custom_call.1} parent=113 // pred_check_branch
                %1009 = sbr.rel target = $region140
              $region139: #{tpu_custom_call.1} parent=113 // pred_region
                _
              $region140: #{tpu_custom_call.1} parent=113 // pred_fallthru
                _
            $region114: #{tpu_custom_call.1} parent=109 // pred_fallthru
              _
            // Predicated region
            $region115: #{tpu_custom_call.1} parent=109 // pred_check
              _
            $region116: #{tpu_custom_call.1} parent=109 // pred_check_branch
              %971 = sbr.rel target = $region118
            $region117: #{tpu_custom_call.1} parent=109 // pred_region
              %s973 = ssub.s32 256, 1
              loop: start=0, step=1, limit=1
              $region119: #{tpu_custom_call.1} parent=117 // loop_pre_header
                _
              $region120: #{tpu_custom_call.1} parent=117 // loop_header
                %s975 = sphi 0, %s979
                %p976 = scmp.ge.s32.totalorder %s975, 1
                %s980 = sphi %s902, %s902
                %s981 = sphi %s965, %s965
              $region121: #{tpu_custom_call.1} parent=117 // loop_header_branch
                %978 = sbr.rel (%p976) target = $region125
              $region122: #{tpu_custom_call.1} parent=117 // loop_body
                %v982 = vld [vmem:[%s980] sm:%s973]
                %983 = vst [vmem:[%s981] sm:%s973] %v982
                %v984 = vld [vmem:[%s980 + $0x8] sm:%s973]
                %985 = vst [vmem:[%s981 + $0x10] sm:%s973] %v984
                %v986 = vld [vmem:[%s980 + $0x10] sm:%s973]
                %987 = vst [vmem:[%s981 + $0x20] sm:%s973] %v986
                %v988 = vld [vmem:[%s980 + $0x18] sm:%s973]
                %989 = vst [vmem:[%s981 + $0x30] sm:%s973] %v988
              $region123: #{tpu_custom_call.1} parent=117 // loop_footer
                %s979 = sadd.s32 1, %s975
              $region124: #{tpu_custom_call.1} parent=117 // loop_footer_branch
                %974 = sbr.rel target = $region120
              $region125: #{tpu_custom_call.1} parent=117 // loop_exit
                _
            $region118: #{tpu_custom_call.1} parent=109 // pred_fallthru
              _
          $region110: #{tpu_custom_call.1} parent=105 // pred_fallthru
            _
          %1010 = vnop
        $region106: #{tpu_custom_call.1} parent=47 // pred_fallthru
          _
        // Predicated region
        $region141: #{tpu_custom_call.1} parent=47 // pred_check
          %p1011 = pneg %p268
        $region142: #{tpu_custom_call.1} parent=47 // pred_check_branch
          %1013 = sbr.rel (%p1011) target = $region144
        $region143: #{tpu_custom_call.1} parent=47 // pred_region
          %s1014 = smul.addr %s30, 8
          %s1015 = sadd.s32 %s31, %s1014
          %s1016 = smul.addr %s1015, 8
          %s1017 = scalar_lea.vmem %s9, %s1016
          // Predicated region
          $region145: #{tpu_custom_call.1} parent=143 // pred_check
            _
          $region146: #{tpu_custom_call.1} parent=143 // pred_check_branch
            %1019 = sbr.rel (0) target = $region148
          $region147: #{tpu_custom_call.1} parent=143 // pred_region
            // Predicated region
            $region149: #{tpu_custom_call.1} parent=147 // pred_check
              _
            $region150: #{tpu_custom_call.1} parent=147 // pred_check_branch
              %1021 = sbr.rel (0) target = $region152
            $region151: #{tpu_custom_call.1} parent=147 // pred_region
              // Predicated region
              $region164: #{tpu_custom_call.1} parent=151 // pred_check
                _
              $region165: #{tpu_custom_call.1} parent=151 // pred_check_branch
                %1043 = sbr.rel (0) target = $region167
              $region166: #{tpu_custom_call.1} parent=151 // pred_region
                loop: start=0, step=1, limit=1
                $region168: #{tpu_custom_call.1} parent=166 // loop_pre_header
                  _
                $region169: #{tpu_custom_call.1} parent=166 // loop_header
                  %s1045 = sphi 0, %s1049
                  %p1046 = scmp.ge.s32.totalorder %s1045, 1
                  %s1050 = sphi %s906, %s906
                  %s1051 = sphi %s1017, %s1017
                $region170: #{tpu_custom_call.1} parent=166 // loop_header_branch
                  %1048 = sbr.rel (%p1046) target = $region174
                $region171: #{tpu_custom_call.1} parent=166 // loop_body
                  %v1052 = vld [vmem:[%s1050] sm:$0xff]
                  %1053 = vst [vmem:[%s1051] sm:$0xff] %v1052
                  %v1054 = vld [vmem:[%s1050 + $0x8] sm:$0xff]
                  %1055 = vst [vmem:[%s1051 + $0x10] sm:$0xff] %v1054
                  %v1056 = vld [vmem:[%s1050 + $0x10] sm:$0xff]
                  %1057 = vst [vmem:[%s1051 + $0x20] sm:$0xff] %v1056
                  %v1058 = vld [vmem:[%s1050 + $0x18] sm:$0xff]
                  %1059 = vst [vmem:[%s1051 + $0x30] sm:$0xff] %v1058
                $region172: #{tpu_custom_call.1} parent=166 // loop_footer
                  %s1049 = sadd.s32 1, %s1045
                $region173: #{tpu_custom_call.1} parent=166 // loop_footer_branch
                  %1044 = sbr.rel target = $region169
                $region174: #{tpu_custom_call.1} parent=166 // loop_exit
                  _
              $region167: #{tpu_custom_call.1} parent=151 // pred_fallthru
                _
              // Predicated region
              $region175: #{tpu_custom_call.1} parent=151 // pred_check
                _
              $region176: #{tpu_custom_call.1} parent=151 // pred_check_branch
                %1061 = sbr.rel target = $region178
              $region177: #{tpu_custom_call.1} parent=151 // pred_region
                _
              $region178: #{tpu_custom_call.1} parent=151 // pred_fallthru
                _
            $region152: #{tpu_custom_call.1} parent=147 // pred_fallthru
              _
            // Predicated region
            $region153: #{tpu_custom_call.1} parent=147 // pred_check
              _
            $region154: #{tpu_custom_call.1} parent=147 // pred_check_branch
              %1023 = sbr.rel target = $region156
            $region155: #{tpu_custom_call.1} parent=147 // pred_region
              %s1025 = ssub.s32 256, 1
              loop: start=0, step=1, limit=1
              $region157: #{tpu_custom_call.1} parent=155 // loop_pre_header
                _
              $region158: #{tpu_custom_call.1} parent=155 // loop_header
                %s1027 = sphi 0, %s1031
                %p1028 = scmp.ge.s32.totalorder %s1027, 1
                %s1032 = sphi %s906, %s906
                %s1033 = sphi %s1017, %s1017
              $region159: #{tpu_custom_call.1} parent=155 // loop_header_branch
                %1030 = sbr.rel (%p1028) target = $region163
              $region160: #{tpu_custom_call.1} parent=155 // loop_body
                %v1034 = vld [vmem:[%s1032] sm:%s1025]
                %1035 = vst [vmem:[%s1033] sm:%s1025] %v1034
                %v1036 = vld [vmem:[%s1032 + $0x8] sm:%s1025]
                %1037 = vst [vmem:[%s1033 + $0x10] sm:%s1025] %v1036
                %v1038 = vld [vmem:[%s1032 + $0x10] sm:%s1025]
                %1039 = vst [vmem:[%s1033 + $0x20] sm:%s1025] %v1038
                %v1040 = vld [vmem:[%s1032 + $0x18] sm:%s1025]
                %1041 = vst [vmem:[%s1033 + $0x30] sm:%s1025] %v1040
              $region161: #{tpu_custom_call.1} parent=155 // loop_footer
                %s1031 = sadd.s32 1, %s1027
              $region162: #{tpu_custom_call.1} parent=155 // loop_footer_branch
                %1026 = sbr.rel target = $region158
              $region163: #{tpu_custom_call.1} parent=155 // loop_exit
                _
            $region156: #{tpu_custom_call.1} parent=147 // pred_fallthru
              _
          $region148: #{tpu_custom_call.1} parent=143 // pred_fallthru
            _
          %1062 = vnop
        $region144: #{tpu_custom_call.1} parent=47 // pred_fallthru
          _
      $region48: #{tpu_custom_call.1} parent=5 // pred_fallthru
        _
      %p1063 = scmp.le.s32.totalorder 2, %s21
      // Predicated region
      $region179: #{tpu_custom_call.1} parent=5 // pred_check
        %p1064 = pneg %p1063
      $region180: #{tpu_custom_call.1} parent=5 // pred_check_branch
        %1066 = sbr.rel (%p1064) target = $region182
      $region181: #{tpu_custom_call.1} parent=5 // pred_region
        %s1067 = ssub.s32 %s21, 2
        // Predicated region
        $region183: #{tpu_custom_call.1} parent=181 // pred_check
          %p1068 = pneg %p218
        $region184: #{tpu_custom_call.1} parent=181 // pred_check_branch
          %1070 = sbr.rel (%p1068) target = $region186
        $region185: #{tpu_custom_call.1} parent=181 // pred_region
          %s1071 = sand.u32 %s203, 1
          %s1072 = sand.u32 %s203, 1
          %s1073 = smul.addr %s1072, 32
          %s1074 = scalar_lea.vmem [#allocation9], %s1073
        $region186: #{tpu_custom_call.1} parent=181 // pred_fallthru
          _
        // Predicated region
        $region187: #{tpu_custom_call.1} parent=181 // pred_check
          %p1075 = pneg %p246
        $region188: #{tpu_custom_call.1} parent=181 // pred_check_branch
          %1077 = sbr.rel (%p1075) target = $region190
        $region189: #{tpu_custom_call.1} parent=181 // pred_region
          %s1078 = sand.u32 %s231, 1
          %s1079 = sand.u32 %s231, 1
          %s1080 = smul.addr %s1079, 32
          %s1081 = scalar_lea.vmem [#allocation10], %s1080
        $region190: #{tpu_custom_call.1} parent=181 // pred_fallthru
          _
        // Predicated region
        $region191: #{tpu_custom_call.1} parent=181 // pred_check
          %p1082 = pneg %p274
        $region192: #{tpu_custom_call.1} parent=181 // pred_check_branch
          %1084 = sbr.rel (%p1082) target = $region194
        $region193: #{tpu_custom_call.1} parent=181 // pred_region
          %s1085 = sand.u32 %s259, 1
          %s1086 = sand.u32 %s259, 1
          %s1087 = smul.addr %s1086, 32
          %s1088 = scalar_lea.vmem [#allocation11], %s1087
        $region194: #{tpu_custom_call.1} parent=181 // pred_fallthru
          _
      $region182: #{tpu_custom_call.1} parent=5 // pred_fallthru
        _
    $region6: #{tpu_custom_call.1} parent=1 // loop_footer
      %s25 = sadd.s32 1, %s21
    $region7: #{tpu_custom_call.1} parent=1 // loop_footer_branch
      %20 = sbr.rel target = $region3
    $region8: #{tpu_custom_call.1} parent=1 // loop_exit
      _
    %1089 = vsyncpa [#allocation3], 1
    %s1090 = scalar_lea.sflag [#allocation3], 1
    %1091 = vsyncpa %s1090, 1
    %1092 = vsyncpa [#allocation5], 1
    %1093 = vsyncpa [#allocation8], 1

</llo_original>
